<compile_context>
chip_gen: v7x
topology: tpu7x:2x2x1
jax: 0.10.0
libtpu: 0.0.40
codegen_flags: <defaults>
</compile_context>

<pallas_src>
import functools

import jax
import jax.numpy as jnp
import numpy as np
from jax.experimental import pallas as pl
from jax.experimental.pallas import tpu as pltpu


# ----------------------------------------------------------------------------
# Helpers
# ----------------------------------------------------------------------------
def _round_up(x, m):
    return (x + m - 1) // m * m


def _default_vmem_limit():
    try:
        cap = int(pltpu.get_tpu_info().vmem_capacity_bytes)
        return min((cap * 3) // 4, 96 * 1024 * 1024)
    except Exception:
        return 32 * 1024 * 1024


_VMEM_LIMIT = _default_vmem_limit()
_PAD_L = 8  # aligned start column of real data inside the conv scratch tile


def _pad_last(a, to):
    pad = to - a.shape[-1]
    if pad == 0:
        return a
    widths = [(0, 0)] * (a.ndim - 1) + [(0, pad)]
    return jnp.pad(a, widths)


def _pad_axis(a, axis, to):
    pad = to - a.shape[axis]
    if pad == 0:
        return a
    widths = [(0, 0)] * a.ndim
    widths[axis] = (0, pad)
    return jnp.pad(a, widths)


def _conv_row_tile(H, W, Ci, Co, in_itemsize, n_batch, vmem_limit=_VMEM_LIMIT):
    """Largest divisor of H whose per-step working set fits ~1/3 of the VMEM limit.
    Keeps >=2 row tiles when batch==1 so v7x's two TensorCores both get work."""
    budget = max(vmem_limit // 3, 2 << 20)
    wpad = _round_up(_PAD_L + W + 1, 8)
    max_th = H if n_batch >= 2 else max(H // 2, 1)
    feasible = []
    for th in range(1, max_th + 1):
        if H % th:
            continue
        need = (2 * th * W * Ci * in_itemsize      # main input block (double-buffered)
                + 4 * W * Ci * in_itemsize         # halo rows (double-buffered)
                + (th + 2) * wpad * Ci * 4         # padded-tile scratch (f32)
                + th * W * Ci * 2                  # bf16 patch staging
                + 2 * th * W * Co * 4              # f32 accumulator + y staging
                + 2 * th * W * Co * 2              # bf16 output block (double-buffered)
                + 2 * 9 * Ci * Co * 2)             # bf16 weights (double-buffered)
        if need <= budget:
            feasible.append(th)
    if not feasible:
        return 1
    best = max(feasible)
    aligned = [t for t in feasible if (t * W) % 256 == 0]  # fill the MXU M dimension
    if aligned and 2 * max(aligned) >= best:
        best = max(aligned)
    return best


def _pool_row_tile(Ho, W, C, n_batch, vmem_limit=_VMEM_LIMIT):
    budget = max(vmem_limit // 3, 2 << 20)
    max_t = Ho if n_batch >= 2 else max(Ho // 2, 1)
    best = 1
    for t in range(1, max_t + 1):
        if Ho % t:
            continue
        need = (2 * t * 2 * W * C * 2              # bf16 input block (double-buffered)
                + 2 * t * (W // 2) * C * (4 + 4))  # f32 values + int32 indices
        if need <= budget:
            best = t
    return best


# ----------------------------------------------------------------------------
# Kernel 1/2: 3x3 conv (stride 1, pad 1) as 9 accumulating per-tap bf16 dots.
# Optionally fuses the previous layer's BN affine + ReLU onto the input path
# (halo rows are re-zeroed at image boundaries AFTER the affine, since
# relu(0*scale+shift) != 0). Also emits per-tile channel sum / sum-of-squares
# so BN statistics never require re-reading the activation from HBM.
# ----------------------------------------------------------------------------
def _conv3x3_kernel(TH, W, Cin, Cout, R, apply_input_act,
                    x_ref, top_ref, bot_ref, scale_ref, shift_ref,
                    w_ref, b_ref, y_ref, stats_ref, xt_ref):
    r = pl.program_id(1)
    c0 = _PAD_L

    if apply_input_act:
        scale = scale_ref[...].reshape(1, 1, Cin)      # hoisted: built once per step
        shift = shift_ref[...].reshape(1, 1, Cin)

        def transform(v):
            return jnp.maximum(v.astype(jnp.float32) * scale + shift, 0.0)
    else:
        def transform(v):
            return v.astype(jnp.float32)

    # Zero conv-padding columns (left/right of the data) — tiny, every step.
    zc = jnp.zeros((TH + 2, 1, Cin), jnp.float32)
    xt_ref[:, c0 - 1:c0, :] = zc
    xt_ref[:, c0 + W:c0 + W + 1, :] = zc

    # Halo rows clamped by the index_map; mask them to zero at image borders.
    top_m = jnp.where(r > 0, 1.0, 0.0)
    bot_m = jnp.where(r < R - 1, 1.0, 0.0)
    xt_ref[0:1, c0:c0 + W, :] = transform(top_ref[0]) * top_m
    xt_ref[1:TH + 1, c0:c0 + W, :] = transform(x_ref[0])
    xt_ref[TH + 1:TH + 2, c0:c0 + W, :] = transform(bot_ref[0]) * bot_m

    # 9 accumulating dots (no lane-axis concat); operands bf16, accumulation f32.
    acc = jnp.zeros((TH * W, Cout), jnp.float32)
    for dh in range(3):
        for dw in range(3):
            patch = xt_ref[dh:dh + TH, c0 - 1 + dw:c0 - 1 + dw + W, :]
            patch = patch.reshape(TH * W, Cin).astype(jnp.bfloat16)
            acc = acc + jnp.dot(patch, w_ref[dh * 3 + dw],
                                preferred_element_type=jnp.float32)
    y = acc + b_ref[...]                                         # (TH*W, Cout) f32
    y_ref[0] = y.reshape(TH, W, Cout).astype(y_ref.dtype)

    # Per-tile BN partial statistics in f32 (note: E[x^2]-E[x]^2 folding happens
    # in the wrapper; acceptable for activation-scale magnitudes).
    stats_ref[0, 0] = jnp.concatenate(
        [jnp.sum(y, axis=0, keepdims=True),
         jnp.sum(y * y, axis=0, keepdims=True)], axis=0)         # (2, Cout)


def conv3x3_bn_stats(x_nhwc, w9, b, in_scale, in_shift, *, apply_input_act,
                     row_tile=None, vmem_limit=_VMEM_LIMIT):
    """x (N,H,W,Ci), w9 (9,Ci,Co) bf16-castable, b (Co,). Returns bf16 y + f32 stats."""
    N, H, W, Cin = x_nhwc.shape
    Cout = w9.shape[-1]
    in_itemsize = jnp.dtype(x_nhwc.dtype).itemsize
    TH = row_tile or _conv_row_tile(H, W, Cin, Cout, in_itemsize, N, vmem_limit)
    assert H % TH == 0, f"row tile {TH} must divide H={H}"
    R = H // TH
    Wpad = _round_up(_PAD_L + W + 1, 8)

    kern = functools.partial(_conv3x3_kernel, TH, W, Cin, Cout, R, apply_input_act)
    y, stats = pl.pallas_call(
        kern,
        out_shape=(jax.ShapeDtypeStruct((N, H, W, Cout), jnp.bfloat16),
                   jax.ShapeDtypeStruct((N, R, 2, Cout), jnp.float32)),
        grid=(N, R),
        in_specs=[
            # main rows of this tile
            pl.BlockSpec((1, TH, W, Cin), lambda n, r: (n, r, 0, 0)),
            # 1-row halo above (clamped; masked in-kernel when r == 0)
            pl.BlockSpec((1, 1, W, Cin),
                         lambda n, r: (n, jnp.maximum(r * TH - 1, 0), 0, 0)),
            # 1-row halo below (clamped; masked in-kernel when r == R-1)
            pl.BlockSpec((1, 1, W, Cin),
                         lambda n, r: (n, jnp.minimum(r * TH + TH, H - 1), 0, 0)),
            pl.BlockSpec((1, Cin), lambda n, r: (0, 0)),
            pl.BlockSpec((1, Cin), lambda n, r: (0, 0)),
            pl.BlockSpec((9, Cin, Cout), lambda n, r: (0, 0, 0)),
            pl.BlockSpec((1, Cout), lambda n, r: (0, 0)),
        ],
        out_specs=(
            pl.BlockSpec((1, TH, W, Cout), lambda n, r: (n, r, 0, 0)),
            pl.BlockSpec((1, 1, 2, Cout), lambda n, r: (n, r, 0, 0)),
        ),
        scratch_shapes=[pltpu.VMEM((TH + 2, Wpad, Cin), jnp.float32)],
        compiler_params=pltpu.CompilerParams(
            dimension_semantics=("parallel", "parallel"),
            vmem_limit_bytes=vmem_limit),
    )(x_nhwc, x_nhwc, x_nhwc,
      in_scale.reshape(1, Cin).astype(jnp.float32),
      in_shift.reshape(1, Cin).astype(jnp.float32),
      w9.astype(jnp.bfloat16),
      b.reshape(1, Cout).astype(jnp.float32))
    return y, stats


def _bn_affine_from_stats(stats, gamma, beta, count, eps):
    """Fold per-tile sums into per-channel scale/shift (training-mode BN, biased var)."""
    s = jnp.sum(stats[:, :, 0, :], axis=(0, 1))
    ssq = jnp.sum(stats[:, :, 1, :], axis=(0, 1))
    mean = s / count
    var = jnp.maximum(ssq / count - mean * mean, 0.0)
    scale = gamma * jax.lax.rsqrt(var + eps)
    shift = beta - mean * scale
    return scale, shift


# ----------------------------------------------------------------------------
# Kernel 3: fused BN affine + ReLU + 2x2/stride-2 maxpool with argmax.
# Input is a metadata view (N, Ho, 2, Wo, 2*C): minor block dims are (Wo, 2C),
# so the VMEM block is lane/sublane-dense; the 2x2 split is outer-dim indexing
# plus 128-aligned lane slices. Indices follow PyTorch: flat h*W + w, ties ->
# earliest window element (row-major within the window).
# ----------------------------------------------------------------------------
def _bn_relu_pool_kernel(THo, Wo, W, C, x_ref, scale_ref, shift_ref, v_ref, i_ref):
    r = pl.program_id(1)
    scale = scale_ref[...].reshape(1, 1, C)
    shift = shift_ref[...].reshape(1, 1, C)
    x = x_ref[0]                                       # (THo, 2, Wo, 2*C)

    row0 = 2 * r * THo                                 # global input-row offset of tile
    orow = jax.lax.broadcasted_iota(jnp.int32, (THo, Wo, 1), 0)
    ocol = jax.lax.broadcasted_iota(jnp.int32, (THo, Wo, 1), 1)

    best_v = jnp.full((THo, Wo, C), -jnp.inf, jnp.float32)
    best_i = jnp.zeros((THo, Wo, C), jnp.int32)
    for dh in range(2):
        xr = x[:, dh, :, :]                            # (THo, Wo, 2*C)
        for dw in range(2):
            v = xr[:, :, dw * C:(dw + 1) * C].astype(jnp.float32)
            a = jnp.maximum(v * scale + shift, 0.0)
            idx = (row0 + 2 * orow + dh) * W + (2 * ocol + dw)   # (THo, Wo, 1)
            take = a > best_v
            best_v = jnp.where(take, a, best_v)
            best_i = jnp.where(take, idx, best_i)      # idx broadcast over lanes once
    v_ref[0] = best_v
    i_ref[0] = best_i


def bn_relu_maxpool_argmax(y_nhwc, scale, shift, *, row_tile=None,
                           vmem_limit=_VMEM_LIMIT):
    N, H, W, C = y_nhwc.shape
    Ho, Wo = H // 2, W // 2
    THo = row_tile or _pool_row_tile(Ho, W, C, N, vmem_limit)
    assert Ho % THo == 0, f"pool row tile {THo} must divide Ho={Ho}"
    Rp = Ho // THo
    yr = y_nhwc.reshape(N, Ho, 2, Wo, 2 * C)           # contiguous view (no copy)

    kern = functools.partial(_bn_relu_pool_kernel, THo, Wo, W, C)
    return pl.pallas_call(
        kern,
        out_shape=(jax.ShapeDtypeStruct((N, Ho, Wo, C), jnp.float32),
                   jax.ShapeDtypeStruct((N, Ho, Wo, C), jnp.int32)),
        grid=(N, Rp),
        in_specs=[
            pl.BlockSpec((1, THo, 2, Wo, 2 * C), lambda n, r: (n, r, 0, 0, 0)),
            pl.BlockSpec((1, C), lambda n, r: (0, 0)),
            pl.BlockSpec((1, C), lambda n, r: (0, 0)),
        ],
        out_specs=(
            pl.BlockSpec((1, THo, Wo, C), lambda n, r: (n, r, 0, 0)),
            pl.BlockSpec((1, THo, Wo, C), lambda n, r: (n, r, 0, 0)),
        ),
        compiler_params=pltpu.CompilerParams(
            dimension_semantics=("parallel", "parallel"),
            vmem_limit_bytes=vmem_limit),
    )(yr, scale.reshape(1, C).astype(jnp.float32),
      shift.reshape(1, C).astype(jnp.float32))


# ----------------------------------------------------------------------------
# SegnetDown2 forward
# ----------------------------------------------------------------------------
def init_params(key, in_channels, out_channels):
    ks = jax.random.split(key, 8)
    p = {}
    cin = in_channels
    for i in (1, 2):
        k0, k1, k2, k3 = ks[(i - 1) * 4:(i - 1) * 4 + 4]
        p[f"w{i}"] = 0.1 * jax.random.normal(k0, (3, 3, cin, out_channels),
                                             jnp.float32)   # HWIO
        p[f"b{i}"] = 0.1 * jax.random.normal(k1, (out_channels,), jnp.float32)
        p[f"gamma{i}"] = 1.0 + 0.1 * jax.random.normal(k2, (out_channels,),
                                                       jnp.float32)
        p[f"beta{i}"] = 0.1 * jax.random.normal(k3, (out_channels,), jnp.float32)
        cin = out_channels
    return p


def segnet_down2(x_nchw, params, eps=1e-5, row_tile=None, lane_pad=128):
    x = jnp.transpose(x_nchw, (0, 2, 3, 1)).astype(jnp.float32)  # NCHW -> NHWC
    N, H, W, Cin = x.shape
    Cout = params["w1"].shape[-1]
    Cop = _round_up(Cout, lane_pad)    # lane-dense channel count through the pipeline
    count = float(N * H * W)

    # Zero-padded params: padded channels stay exactly 0 through conv/BN/ReLU/pool.
    w1 = _pad_last(params["w1"], Cop).reshape(9, Cin, Cop)
    b1 = _pad_last(params["b1"], Cop)
    g1 = _pad_last(params["gamma1"], Cop)
    be1 = _pad_last(params["beta1"], Cop)
    w2 = _pad_axis(_pad_last(params["w2"], Cop), 2, Cop).reshape(9, Cop, Cop)
    b2 = _pad_last(params["b2"], Cop)
    g2 = _pad_last(params["gamma2"], Cop)
    be2 = _pad_last(params["beta2"], Cop)

    # Layer 1: conv + bias (raw), BN1 stats emitted from the kernel.
    ident_s = jnp.ones((Cin,), jnp.float32)
    ident_b = jnp.zeros((Cin,), jnp.float32)
    y1, st1 = conv3x3_bn_stats(x, w1, b1, ident_s, ident_b,
                               apply_input_act=False, row_tile=row_tile)
    scale1, shift1 = _bn_affine_from_stats(st1, g1, be1, count, eps)

    # Layer 2: BN1 affine + ReLU fused into conv2's input path; BN2 stats emitted.
    y2, st2 = conv3x3_bn_stats(y1, w2, b2, scale1, shift1,
                               apply_input_act=True, row_tile=row_tile)
    scale2, shift2 = _bn_affine_from_stats(st2, g2, be2, count, eps)

    unpooled_shape = (N, Cout, H, W)   # reported NCHW like torch .size()
    pool_tile = max(row_tile // 2, 1) if row_tile else None
    vals, idxs = bn_relu_maxpool_argmax(y2, scale2, shift2, row_tile=pool_tile)
    vals = jnp.transpose(vals[..., :Cout], (0, 3, 1, 2))   # drop pad, NHWC -> NCHW
    idxs = jnp.transpose(idxs[..., :Cout], (0, 3, 1, 2))
    return vals, idxs, unpooled_shape


# ----------------------------------------------------------------------------
# Pure-JAX reference (light sanity check)
# ----------------------------------------------------------------------------
def _reference(x_nchw, params, eps=1e-5):
    x = jnp.transpose(x_nchw, (0, 2, 3, 1)).astype(jnp.float32)
    for i in (1, 2):
        y = jax.lax.conv_general_dilated(
            x, params[f"w{i}"], window_strides=(1, 1), padding="SAME",
            dimension_numbers=("NHWC", "HWIO", "NHWC")) + params[f"b{i}"]
        mean = jnp.mean(y, axis=(0, 1, 2))
        var = jnp.mean((y - mean) ** 2, axis=(0, 1, 2))
        y = (y - mean) / jnp.sqrt(var + eps) * params[f"gamma{i}"] + params[f"beta{i}"]
        x = jnp.maximum(y, 0.0)
    pooled = jax.lax.reduce_window(x, -jnp.inf, jax.lax.max,
                                   (1, 2, 2, 1), (1, 2, 2, 1), "VALID")
    return jnp.transpose(pooled, (0, 3, 1, 2)), jnp.transpose(x, (0, 3, 1, 2))


if __name__ == "__main__":
    key = jax.random.PRNGKey(0)
    kx, kp = jax.random.split(key)
    N, Cin, Cout, H, W = 2, 4, 8, 16, 16
    x = jax.random.normal(kx, (N, Cin, H, W), jnp.float32)
    params = init_params(kp, Cin, Cout)

    # row_tile=8 -> 2 row tiles per image, exercising the halo/masking paths.
    vals, idxs, unpooled_shape = segnet_down2(x, params, row_tile=8)
    vals = jax.block_until_ready(vals)
    idxs = jax.block_until_ready(idxs)

    # Sanity: pooled values match the f32 lax reference (bf16 MXU path -> looser tol);
    # indices gather the pooled values back out of the pre-pool activation.
    ref_vals, pre_pool_nchw = _reference(x, params)
    np.testing.assert_allclose(np.asarray(vals), np.asarray(ref_vals),
                               rtol=2e-2, atol=2e-2)
    flat = np.asarray(pre_pool_nchw).reshape(N, Cout, H * W)
    gathered = np.take_along_axis(
        flat, np.asarray(idxs).reshape(N, Cout, -1), axis=-1
    ).reshape(vals.shape)
    np.testing.assert_allclose(gathered, np.asarray(vals), rtol=2e-2, atol=2e-2)
    assert unpooled_shape == (N, Cout, H, W)

    print("KERNEL_OK")
</pallas_src>

<mosaic_0001>
module attributes {stable_mosaic.version = 11 : i64} {
  func.func @_conv3x3_kernel(%arg0: i32, %arg1: i32, %arg2: memref<1x8x16x4xf32, #tpu.memory_space<vmem>>, %arg3: memref<1x1x16x4xf32, #tpu.memory_space<vmem>>, %arg4: memref<1x1x16x4xf32, #tpu.memory_space<vmem>>, %arg5: memref<1x4xf32, #tpu.memory_space<vmem>>, %arg6: memref<1x4xf32, #tpu.memory_space<vmem>>, %arg7: memref<9x4x128xbf16, #tpu.memory_space<vmem>>, %arg8: memref<1x128xf32, #tpu.memory_space<vmem>>, %arg9: memref<1x8x16x128xbf16, #tpu.memory_space<vmem>>, %arg10: memref<1x1x2x128xf32, #tpu.memory_space<vmem>>, %arg11: memref<10x32x4xf32, #tpu.memory_space<vmem>>) attributes {dimension_semantics = [#tpu.dimension_semantics<parallel>, #tpu.dimension_semantics<parallel>], iteration_bounds = array<i64: 2, 2>, scalar_prefetch = 0 : i64, scratch_operands = 1 : i64, tpu.core_type = #tpu.core_type<tc>, window_params = [{transform_indices = @transform_0, window_bounds = array<i64: 1, 8, 16, 4>}, {transform_indices = @transform_1, window_bounds = array<i64: 1, 1, 16, 4>}, {transform_indices = @transform_2, window_bounds = array<i64: 1, 1, 16, 4>}, {pipeline_mode = #tpu.pipeline_mode<synchronous>, transform_indices = @transform_3, window_bounds = array<i64: 1, 4>}, {pipeline_mode = #tpu.pipeline_mode<synchronous>, transform_indices = @transform_4, window_bounds = array<i64: 1, 4>}, {pipeline_mode = #tpu.pipeline_mode<synchronous>, transform_indices = @transform_5, window_bounds = array<i64: 9, 4, 128>}, {pipeline_mode = #tpu.pipeline_mode<synchronous>, transform_indices = @transform_6, window_bounds = array<i64: 1, 128>}, {transform_indices = @transform_7, window_bounds = array<i64: 1, 8, 16, 128>}, {transform_indices = @transform_8, window_bounds = array<i64: 1, 1, 2, 128>}]} {
    %cst = arith.constant 0.000000e+00 : f32
    %0 = vector.broadcast %cst : f32 to vector<10x1x4xf32>
    %c0 = arith.constant 0 : index
    %c7 = arith.constant 7 : index
    %c0_0 = arith.constant 0 : index
    %1 = vector.load %arg11[%c0, %c7, %c0_0] : memref<10x32x4xf32, #tpu.memory_space<vmem>>, vector<10x1x4xf32>
    tpu.vector_store %arg11[%c0, %c7, %c0_0], %0 {strides = array<i32>} : memref<10x32x4xf32, #tpu.memory_space<vmem>>, vector<10x1x4xf32>,
    %c0_1 = arith.constant 0 : index
    %c24 = arith.constant 24 : index
    %c0_2 = arith.constant 0 : index
    %2 = vector.load %arg11[%c0_1, %c24, %c0_2] : memref<10x32x4xf32, #tpu.memory_space<vmem>>, vector<10x1x4xf32>
    tpu.vector_store %arg11[%c0_1, %c24, %c0_2], %0 {strides = array<i32>} : memref<10x32x4xf32, #tpu.memory_space<vmem>>, vector<10x1x4xf32>,
    %c0_i32 = arith.constant 0 : i32
    %3 = arith.cmpi sgt, %arg1, %c0_i32 : i32
    %cst_3 = arith.constant 1.000000e+00 : f32
    %cst_4 = arith.constant 0.000000e+00 : f32
    %4 = arith.select %3, %cst_3, %cst_4 : f32
    %c1_i32 = arith.constant 1 : i32
    %5 = arith.cmpi slt, %arg1, %c1_i32 : i32
    %cst_5 = arith.constant 1.000000e+00 : f32
    %cst_6 = arith.constant 0.000000e+00 : f32
    %6 = arith.select %5, %cst_5, %cst_6 : f32
    %c0_7 = arith.constant 0 : index
    %c0_8 = arith.constant 0 : index
    %c0_9 = arith.constant 0 : index
    %c0_10 = arith.constant 0 : index
    %7 = vector.load %arg3[%c0_7, %c0_8, %c0_9, %c0_10] : memref<1x1x16x4xf32, #tpu.memory_space<vmem>>, vector<1x1x16x4xf32>
    %8 = vector.shape_cast %7 : vector<1x1x16x4xf32> to vector<1x16x4xf32>
    %9 = vector.broadcast %4 : f32 to vector<1x16x4xf32>
    %10 = arith.mulf %8, %9 : vector<1x16x4xf32>
    %c0_11 = arith.constant 0 : index
    %c8 = arith.constant 8 : index
    %c0_12 = arith.constant 0 : index
    %11 = vector.load %arg11[%c0_11, %c8, %c0_12] : memref<10x32x4xf32, #tpu.memory_space<vmem>>, vector<1x16x4xf32>
    tpu.vector_store %arg11[%c0_11, %c8, %c0_12], %10 {strides = array<i32>} : memref<10x32x4xf32, #tpu.memory_space<vmem>>, vector<1x16x4xf32>,
    %c0_13 = arith.constant 0 : index
    %c0_14 = arith.constant 0 : index
    %c0_15 = arith.constant 0 : index
    %c0_16 = arith.constant 0 : index
    %12 = vector.load %arg2[%c0_13, %c0_14, %c0_15, %c0_16] : memref<1x8x16x4xf32, #tpu.memory_space<vmem>>, vector<1x8x16x4xf32>
    %13 = vector.shape_cast %12 : vector<1x8x16x4xf32> to vector<8x16x4xf32>
    %c1 = arith.constant 1 : index
    %c8_17 = arith.constant 8 : index
    %c0_18 = arith.constant 0 : index
    %14 = vector.load %arg11[%c1, %c8_17, %c0_18] : memref<10x32x4xf32, #tpu.memory_space<vmem>>, vector<8x16x4xf32>
    tpu.vector_store %arg11[%c1, %c8_17, %c0_18], %13 {strides = array<i32>} : memref<10x32x4xf32, #tpu.memory_space<vmem>>, vector<8x16x4xf32>,
    %c0_19 = arith.constant 0 : index
    %c0_20 = arith.constant 0 : index
    %c0_21 = arith.constant 0 : index
    %c0_22 = arith.constant 0 : index
    %15 = vector.load %arg4[%c0_19, %c0_20, %c0_21, %c0_22] : memref<1x1x16x4xf32, #tpu.memory_space<vmem>>, vector<1x1x16x4xf32>
    %16 = vector.shape_cast %15 : vector<1x1x16x4xf32> to vector<1x16x4xf32>
    %17 = vector.broadcast %6 : f32 to vector<1x16x4xf32>
    %18 = arith.mulf %16, %17 : vector<1x16x4xf32>
    %c9 = arith.constant 9 : index
    %c8_23 = arith.constant 8 : index
    %c0_24 = arith.constant 0 : index
    %19 = vector.load %arg11[%c9, %c8_23, %c0_24] : memref<10x32x4xf32, #tpu.memory_space<vmem>>, vector<1x16x4xf32>
    tpu.vector_store %arg11[%c9, %c8_23, %c0_24], %18 {strides = array<i32>} : memref<10x32x4xf32, #tpu.memory_space<vmem>>, vector<1x16x4xf32>,
    %cst_25 = arith.constant 0.000000e+00 : f32
    %20 = vector.broadcast %cst_25 : f32 to vector<128x128xf32>
    %c0_26 = arith.constant 0 : index
    %c7_27 = arith.constant 7 : index
    %c0_28 = arith.constant 0 : index
    %21 = vector.load %arg11[%c0_26, %c7_27, %c0_28] : memref<10x32x4xf32, #tpu.memory_space<vmem>>, vector<8x16x4xf32>
    %22 = vector.shape_cast %21 : vector<8x16x4xf32> to vector<128x4xf32>
    %23 = arith.truncf %22 : vector<128x4xf32> to vector<128x4xbf16>
    %c0_29 = arith.constant 0 : index
    %c0_30 = arith.constant 0 : index
    %c0_31 = arith.constant 0 : index
    %24 = vector.load %arg7[%c0_29, %c0_30, %c0_31] : memref<9x4x128xbf16, #tpu.memory_space<vmem>>, vector<1x4x128xbf16>
    %25 = vector.shape_cast %24 : vector<1x4x128xbf16> to vector<4x128xbf16>
    %cst_32 = arith.constant dense<0.000000e+00> : vector<128x128xf32>
    %26 = tpu.matmul %23, %25, %cst_32 {dimension_numbers = #tpu.dot_dimension_numbers<[1], [0], [0], [1], [0, 0, 1, 1], [], []>} : vector<128x4xbf16>, vector<4x128xbf16>, vector<128x128xf32> -> vector<128x128xf32>
    %27 = arith.addf %20, %26 : vector<128x128xf32>
    %c0_33 = arith.constant 0 : index
    %c8_34 = arith.constant 8 : index
    %c0_35 = arith.constant 0 : index
    %28 = vector.load %arg11[%c0_33, %c8_34, %c0_35] : memref<10x32x4xf32, #tpu.memory_space<vmem>>, vector<8x16x4xf32>
    %29 = vector.shape_cast %28 : vector<8x16x4xf32> to vector<128x4xf32>
    %30 = arith.truncf %29 : vector<128x4xf32> to vector<128x4xbf16>
    %c1_36 = arith.constant 1 : index
    %c0_37 = arith.constant 0 : index
    %c0_38 = arith.constant 0 : index
    %31 = vector.load %arg7[%c1_36, %c0_37, %c0_38] : memref<9x4x128xbf16, #tpu.memory_space<vmem>>, vector<1x4x128xbf16>
    %32 = vector.shape_cast %31 : vector<1x4x128xbf16> to vector<4x128xbf16>
    %cst_39 = arith.constant dense<0.000000e+00> : vector<128x128xf32>
    %33 = tpu.matmul %30, %32, %cst_39 {dimension_numbers = #tpu.dot_dimension_numbers<[1], [0], [0], [1], [0, 0, 1, 1], [], []>} : vector<128x4xbf16>, vector<4x128xbf16>, vector<128x128xf32> -> vector<128x128xf32>
    %34 = arith.addf %27, %33 : vector<128x128xf32>
    %c0_40 = arith.constant 0 : index
    %c9_41 = arith.constant 9 : index
    %c0_42 = arith.constant 0 : index
    %35 = vector.load %arg11[%c0_40, %c9_41, %c0_42] : memref<10x32x4xf32, #tpu.memory_space<vmem>>, vector<8x16x4xf32>
    %36 = vector.shape_cast %35 : vector<8x16x4xf32> to vector<128x4xf32>
    %37 = arith.truncf %36 : vector<128x4xf32> to vector<128x4xbf16>
    %c2 = arith.constant 2 : index
    %c0_43 = arith.constant 0 : index
    %c0_44 = arith.constant 0 : index
    %38 = vector.load %arg7[%c2, %c0_43, %c0_44] : memref<9x4x128xbf16, #tpu.memory_space<vmem>>, vector<1x4x128xbf16>
    %39 = vector.shape_cast %38 : vector<1x4x128xbf16> to vector<4x128xbf16>
    %cst_45 = arith.constant dense<0.000000e+00> : vector<128x128xf32>
    %40 = tpu.matmul %37, %39, %cst_45 {dimension_numbers = #tpu.dot_dimension_numbers<[1], [0], [0], [1], [0, 0, 1, 1], [], []>} : vector<128x4xbf16>, vector<4x128xbf16>, vector<128x128xf32> -> vector<128x128xf32>
    %41 = arith.addf %34, %40 : vector<128x128xf32>
    %c1_46 = arith.constant 1 : index
    %c7_47 = arith.constant 7 : index
    %c0_48 = arith.constant 0 : index
    %42 = vector.load %arg11[%c1_46, %c7_47, %c0_48] : memref<10x32x4xf32, #tpu.memory_space<vmem>>, vector<8x16x4xf32>
    %43 = vector.shape_cast %42 : vector<8x16x4xf32> to vector<128x4xf32>
    %44 = arith.truncf %43 : vector<128x4xf32> to vector<128x4xbf16>
    %c3 = arith.constant 3 : index
    %c0_49 = arith.constant 0 : index
    %c0_50 = arith.constant 0 : index
    %45 = vector.load %arg7[%c3, %c0_49, %c0_50] : memref<9x4x128xbf16, #tpu.memory_space<vmem>>, vector<1x4x128xbf16>
    %46 = vector.shape_cast %45 : vector<1x4x128xbf16> to vector<4x128xbf16>
    %cst_51 = arith.constant dense<0.000000e+00> : vector<128x128xf32>
    %47 = tpu.matmul %44, %46, %cst_51 {dimension_numbers = #tpu.dot_dimension_numbers<[1], [0], [0], [1], [0, 0, 1, 1], [], []>} : vector<128x4xbf16>, vector<4x128xbf16>, vector<128x128xf32> -> vector<128x128xf32>
    %48 = arith.addf %41, %47 : vector<128x128xf32>
    %c1_52 = arith.constant 1 : index
    %c8_53 = arith.constant 8 : index
    %c0_54 = arith.constant 0 : index
    %49 = vector.load %arg11[%c1_52, %c8_53, %c0_54] : memref<10x32x4xf32, #tpu.memory_space<vmem>>, vector<8x16x4xf32>
    %50 = vector.shape_cast %49 : vector<8x16x4xf32> to vector<128x4xf32>
    %51 = arith.truncf %50 : vector<128x4xf32> to vector<128x4xbf16>
    %c4 = arith.constant 4 : index
    %c0_55 = arith.constant 0 : index
    %c0_56 = arith.constant 0 : index
    %52 = vector.load %arg7[%c4, %c0_55, %c0_56] : memref<9x4x128xbf16, #tpu.memory_space<vmem>>, vector<1x4x128xbf16>
    %53 = vector.shape_cast %52 : vector<1x4x128xbf16> to vector<4x128xbf16>
    %cst_57 = arith.constant dense<0.000000e+00> : vector<128x128xf32>
    %54 = tpu.matmul %51, %53, %cst_57 {dimension_numbers = #tpu.dot_dimension_numbers<[1], [0], [0], [1], [0, 0, 1, 1], [], []>} : vector<128x4xbf16>, vector<4x128xbf16>, vector<128x128xf32> -> vector<128x128xf32>
    %55 = arith.addf %48, %54 : vector<128x128xf32>
    %c1_58 = arith.constant 1 : index
    %c9_59 = arith.constant 9 : index
    %c0_60 = arith.constant 0 : index
    %56 = vector.load %arg11[%c1_58, %c9_59, %c0_60] : memref<10x32x4xf32, #tpu.memory_space<vmem>>, vector<8x16x4xf32>
    %57 = vector.shape_cast %56 : vector<8x16x4xf32> to vector<128x4xf32>
    %58 = arith.truncf %57 : vector<128x4xf32> to vector<128x4xbf16>
    %c5 = arith.constant 5 : index
    %c0_61 = arith.constant 0 : index
    %c0_62 = arith.constant 0 : index
    %59 = vector.load %arg7[%c5, %c0_61, %c0_62] : memref<9x4x128xbf16, #tpu.memory_space<vmem>>, vector<1x4x128xbf16>
    %60 = vector.shape_cast %59 : vector<1x4x128xbf16> to vector<4x128xbf16>
    %cst_63 = arith.constant dense<0.000000e+00> : vector<128x128xf32>
    %61 = tpu.matmul %58, %60, %cst_63 {dimension_numbers = #tpu.dot_dimension_numbers<[1], [0], [0], [1], [0, 0, 1, 1], [], []>} : vector<128x4xbf16>, vector<4x128xbf16>, vector<128x128xf32> -> vector<128x128xf32>
    %62 = arith.addf %55, %61 : vector<128x128xf32>
    %c2_64 = arith.constant 2 : index
    %c7_65 = arith.constant 7 : index
    %c0_66 = arith.constant 0 : index
    %63 = vector.load %arg11[%c2_64, %c7_65, %c0_66] : memref<10x32x4xf32, #tpu.memory_space<vmem>>, vector<8x16x4xf32>
    %64 = vector.shape_cast %63 : vector<8x16x4xf32> to vector<128x4xf32>
    %65 = arith.truncf %64 : vector<128x4xf32> to vector<128x4xbf16>
    %c6 = arith.constant 6 : index
    %c0_67 = arith.constant 0 : index
    %c0_68 = arith.constant 0 : index
    %66 = vector.load %arg7[%c6, %c0_67, %c0_68] : memref<9x4x128xbf16, #tpu.memory_space<vmem>>, vector<1x4x128xbf16>
    %67 = vector.shape_cast %66 : vector<1x4x128xbf16> to vector<4x128xbf16>
    %cst_69 = arith.constant dense<0.000000e+00> : vector<128x128xf32>
    %68 = tpu.matmul %65, %67, %cst_69 {dimension_numbers = #tpu.dot_dimension_numbers<[1], [0], [0], [1], [0, 0, 1, 1], [], []>} : vector<128x4xbf16>, vector<4x128xbf16>, vector<128x128xf32> -> vector<128x128xf32>
    %69 = arith.addf %62, %68 : vector<128x128xf32>
    %c2_70 = arith.constant 2 : index
    %c8_71 = arith.constant 8 : index
    %c0_72 = arith.constant 0 : index
    %70 = vector.load %arg11[%c2_70, %c8_71, %c0_72] : memref<10x32x4xf32, #tpu.memory_space<vmem>>, vector<8x16x4xf32>
    %71 = vector.shape_cast %70 : vector<8x16x4xf32> to vector<128x4xf32>
    %72 = arith.truncf %71 : vector<128x4xf32> to vector<128x4xbf16>
    %c7_73 = arith.constant 7 : index
    %c0_74 = arith.constant 0 : index
    %c0_75 = arith.constant 0 : index
    %73 = vector.load %arg7[%c7_73, %c0_74, %c0_75] : memref<9x4x128xbf16, #tpu.memory_space<vmem>>, vector<1x4x128xbf16>
    %74 = vector.shape_cast %73 : vector<1x4x128xbf16> to vector<4x128xbf16>
    %cst_76 = arith.constant dense<0.000000e+00> : vector<128x128xf32>
    %75 = tpu.matmul %72, %74, %cst_76 {dimension_numbers = #tpu.dot_dimension_numbers<[1], [0], [0], [1], [0, 0, 1, 1], [], []>} : vector<128x4xbf16>, vector<4x128xbf16>, vector<128x128xf32> -> vector<128x128xf32>
    %76 = arith.addf %69, %75 : vector<128x128xf32>
    %c2_77 = arith.constant 2 : index
    %c9_78 = arith.constant 9 : index
    %c0_79 = arith.constant 0 : index
    %77 = vector.load %arg11[%c2_77, %c9_78, %c0_79] : memref<10x32x4xf32, #tpu.memory_space<vmem>>, vector<8x16x4xf32>
    %78 = vector.shape_cast %77 : vector<8x16x4xf32> to vector<128x4xf32>
    %79 = arith.truncf %78 : vector<128x4xf32> to vector<128x4xbf16>
    %c8_80 = arith.constant 8 : index
    %c0_81 = arith.constant 0 : index
    %c0_82 = arith.constant 0 : index
    %80 = vector.load %arg7[%c8_80, %c0_81, %c0_82] : memref<9x4x128xbf16, #tpu.memory_space<vmem>>, vector<1x4x128xbf16>
    %81 = vector.shape_cast %80 : vector<1x4x128xbf16> to vector<4x128xbf16>
    %cst_83 = arith.constant dense<0.000000e+00> : vector<128x128xf32>
    %82 = tpu.matmul %79, %81, %cst_83 {dimension_numbers = #tpu.dot_dimension_numbers<[1], [0], [0], [1], [0, 0, 1, 1], [], []>} : vector<128x4xbf16>, vector<4x128xbf16>, vector<128x128xf32> -> vector<128x128xf32>
    %83 = arith.addf %76, %82 : vector<128x128xf32>
    %c0_84 = arith.constant 0 : index
    %c0_85 = arith.constant 0 : index
    %84 = vector.load %arg8[%c0_84, %c0_85] : memref<1x128xf32, #tpu.memory_space<vmem>>, vector<1x128xf32>
    %85 = vector.broadcast %84 : vector<1x128xf32> to vector<128x128xf32>
    %86 = arith.addf %83, %85 : vector<128x128xf32>
    %87 = vector.shape_cast %86 : vector<128x128xf32> to vector<8x16x128xf32>
    %88 = arith.truncf %87 : vector<8x16x128xf32> to vector<8x16x128xbf16>
    %c0_86 = arith.constant 0 : index
    %c0_87 = arith.constant 0 : index
    %c0_88 = arith.constant 0 : index
    %c0_89 = arith.constant 0 : index
    %89 = vector.load %arg9[%c0_86, %c0_87, %c0_88, %c0_89] : memref<1x8x16x128xbf16, #tpu.memory_space<vmem>>, vector<1x8x16x128xbf16>
    %90 = vector.shape_cast %89 : vector<1x8x16x128xbf16> to vector<8x16x128xbf16>
    %91 = vector.shape_cast %88 : vector<8x16x128xbf16> to vector<1x8x16x128xbf16>
    tpu.vector_store %arg9[%c0_86, %c0_87, %c0_88, %c0_89], %91 {strides = array<i32>} : memref<1x8x16x128xbf16, #tpu.memory_space<vmem>>, vector<1x8x16x128xbf16>,
    %cst_90 = arith.constant dense<0.000000e+00> : vector<128xf32>
    %92 = vector.multi_reduction <add>, %86, %cst_90 [0] : vector<128x128xf32> to vector<128xf32>
    %93 = vector.shape_cast %92 : vector<128xf32> to vector<1x128xf32>
    %94 = arith.mulf %86, %86 : vector<128x128xf32>
    %cst_91 = arith.constant dense<0.000000e+00> : vector<128xf32>
    %95 = vector.multi_reduction <add>, %94, %cst_91 [0] : vector<128x128xf32> to vector<128xf32>
    %96 = vector.shape_cast %95 : vector<128xf32> to vector<1x128xf32>
    %97 = tpu.concatenate %93, %96 in 0 : vector<1x128xf32>, vector<1x128xf32> -> vector<2x128xf32>
    %c0_92 = arith.constant 0 : index
    %c0_93 = arith.constant 0 : index
    %c0_94 = arith.constant 0 : index
    %c0_95 = arith.constant 0 : index
    %98 = vector.load %arg10[%c0_92, %c0_93, %c0_94, %c0_95] : memref<1x1x2x128xf32, #tpu.memory_space<vmem>>, vector<1x1x2x128xf32>
    %99 = vector.shape_cast %98 : vector<1x1x2x128xf32> to vector<2x128xf32>
    %100 = vector.shape_cast %97 : vector<2x128xf32> to vector<1x1x2x128xf32>
    tpu.vector_store %arg10[%c0_92, %c0_93, %c0_94, %c0_95], %100 {strides = array<i32>} : memref<1x1x2x128xf32, #tpu.memory_space<vmem>>, vector<1x1x2x128xf32>,
    return
  }
  func.func @transform_0(%arg0: i32, %arg1: i32) -> (i32, i32, i32, i32) {
    %c0_i32 = arith.constant 0 : i32
    %c0_i32_0 = arith.constant 0 : i32
    %c0_i32_1 = arith.constant 0 : i32
    return %arg0, %arg1, %c0_i32, %c0_i32_0 : i32, i32, i32, i32
  }
  func.func @transform_1(%arg0: i32, %arg1: i32) -> (i32, i32, i32, i32) {
    %c8_i32 = arith.constant 8 : i32
    %0 = arith.muli %arg1, %c8_i32 : i32
    %c1_i32 = arith.constant 1 : i32
    %1 = arith.subi %0, %c1_i32 : i32
    %c0_i32 = arith.constant 0 : i32
    %2 = arith.maxsi %1, %c0_i32 : i32
    %c0_i32_0 = arith.constant 0 : i32
    %c0_i32_1 = arith.constant 0 : i32
    %c0_i32_2 = arith.constant 0 : i32
    return %arg0, %2, %c0_i32_0, %c0_i32_1 : i32, i32, i32, i32
  }
  func.func @transform_2(%arg0: i32, %arg1: i32) -> (i32, i32, i32, i32) {
    %c8_i32 = arith.constant 8 : i32
    %0 = arith.muli %arg1, %c8_i32 : i32
    %c8_i32_0 = arith.constant 8 : i32
    %1 = arith.addi %0, %c8_i32_0 : i32
    %c15_i32 = arith.constant 15 : i32
    %2 = arith.minsi %1, %c15_i32 : i32
    %c0_i32 = arith.constant 0 : i32
    %c0_i32_1 = arith.constant 0 : i32
    %c0_i32_2 = arith.constant 0 : i32
    return %arg0, %2, %c0_i32, %c0_i32_1 : i32, i32, i32, i32
  }
  func.func @transform_3(%arg0: i32, %arg1: i32) -> (i32, i32) {
    %c0_i32 = arith.constant 0 : i32
    %c0_i32_0 = arith.constant 0 : i32
    %c0_i32_1 = arith.constant 0 : i32
    return %c0_i32, %c0_i32_0 : i32, i32
  }
  func.func @transform_4(%arg0: i32, %arg1: i32) -> (i32, i32) {
    %c0_i32 = arith.constant 0 : i32
    %c0_i32_0 = arith.constant 0 : i32
    %c0_i32_1 = arith.constant 0 : i32
    return %c0_i32, %c0_i32_0 : i32, i32
  }
  func.func @transform_5(%arg0: i32, %arg1: i32) -> (i32, i32, i32) {
    %c0_i32 = arith.constant 0 : i32
    %c0_i32_0 = arith.constant 0 : i32
    %c0_i32_1 = arith.constant 0 : i32
    %c0_i32_2 = arith.constant 0 : i32
    return %c0_i32, %c0_i32_0, %c0_i32_1 : i32, i32, i32
  }
  func.func @transform_6(%arg0: i32, %arg1: i32) -> (i32, i32) {
    %c0_i32 = arith.constant 0 : i32
    %c0_i32_0 = arith.constant 0 : i32
    %c0_i32_1 = arith.constant 0 : i32
    return %c0_i32, %c0_i32_0 : i32, i32
  }
  func.func @transform_7(%arg0: i32, %arg1: i32) -> (i32, i32, i32, i32) {
    %c0_i32 = arith.constant 0 : i32
    %c0_i32_0 = arith.constant 0 : i32
    %c0_i32_1 = arith.constant 0 : i32
    return %arg0, %arg1, %c0_i32, %c0_i32_0 : i32, i32, i32, i32
  }
  func.func @transform_8(%arg0: i32, %arg1: i32) -> (i32, i32, i32, i32) {
    %c0_i32 = arith.constant 0 : i32
    %c0_i32_0 = arith.constant 0 : i32
    %c0_i32_1 = arith.constant 0 : i32
    return %arg0, %arg1, %c0_i32, %c0_i32_0 : i32, i32, i32, i32
  }
}

</mosaic_0001>

<llo_original>
// kernel: tpu_custom_call.1
$region0: #{tpu_custom_call.1}
  #allocation0 [shape = 'u32[]', space=smem, size = 0x4, offset = 0x4, fixed_abs, tag = 'smem constant byte address 0x4 - core index']
  #allocation1 [shape = 'u32[144,128]{1,0:T(1,128)}', space=vmem, size = 0x12000, scoped, tag = 'internal scratch']
  #allocation2 [shape = 'f32[10,32,4]{2,1,0:T(8,128)}', space=vmem, size = 0x28000, scoped, tag = 'scratch operand']
  %s0 = inlined_call_operand.vmem [shape: f32[2,16,16,4], index: 0, kind: input, shape index: {}]
  %s1 = inlined_call_operand.vmem [shape: f32[2,16,16,4], index: 1, kind: input, shape index: {}]
  %s2 = inlined_call_operand.vmem [shape: f32[2,16,16,4], index: 2, kind: input, shape index: {}]
  %s3 = inlined_call_operand.vmem [shape: f32[1,4], index: 3, kind: input, shape index: {}]
  %s4 = inlined_call_operand.vmem [shape: f32[1,4], index: 4, kind: input, shape index: {}]
  %s5 = inlined_call_operand.vmem [shape: bf16[9,4,128], index: 5, kind: input, shape index: {}]
  %s6 = inlined_call_operand.vmem [shape: f32[1,128], index: 6, kind: input, shape index: {}]
  %s7 = inlined_call_operand.hbm [shape: bf16[2,16,16,128], index: 7, kind: output, shape index: {0}]
  %s8 = inlined_call_operand.hbm [shape: f32[2,2,2,128], index: 8, kind: output, shape index: {1}]
  %9 = xla_tuple %s7, %s8
  %s10 = sld [smem:[#allocation0]]
  $region69: #{tpu_custom_call.1} parent=0
    _
  %s12 = ssub.s32 1, %s10
  %s13 = scalar_select 0, %s12, %s10
  $region1: #{tpu_custom_call.1} parent=0
    #allocation3 [shape = 'u8[65536]{0}', space=vmem, size = 0x10000, scoped, tag = 'output window, operand 0']
    #allocation4 [shape = 's32[2]{0}', space=sflag, size = 0x8, scoped, tag = 'scoped memory for tpu_custom_call.1']
    #allocation5 [shape = 'u8[2048]{0}', space=vmem, size = 0x800, scoped, tag = 'output window, operand 1']
    #allocation6 [shape = 's32[2]{0}', space=sflag, size = 0x8, scoped, tag = 'scoped memory for tpu_custom_call.1']
    %14 = vsyncpa [#allocation4], 0
    %s15 = scalar_lea.sflag [#allocation4], 1
    %16 = vsyncpa %s15, 0
    %17 = vsyncpa [#allocation6], 0
    %s18 = scalar_lea.sflag [#allocation6], 1
    %19 = vsyncpa %s18, 0
    loop: start=0, step=1, limit=6
    $region2: #{tpu_custom_call.1} parent=1 // loop_pre_header
      _
    $region3: #{tpu_custom_call.1} parent=1 // loop_header
      %s21 = sphi 0, %s25
      %p22 = scmp.ge.s32.totalorder %s21, 6
      %s28 = sphi 0, %s40
      %s29 = sphi 0, %s36
      %s30 = sphi 0, %s28
      %s31 = sphi 0, %s29
      %s32 = sphi 0, %s30
      %s33 = sphi 0, %s31
      %s45 = sphi 0, %s47
      %s48 = sphi 0, %s45
      %s49 = sphi 0, %s48
      %s65 = sphi 0, %s49
      %s81 = sphi 0, %s83
      %s84 = sphi 0, %s81
      %s85 = sphi 0, %s84
      %s101 = sphi 0, %s85
      %s117 = sphi 0, %s119
      %s120 = sphi 0, %s117
      %s121 = sphi 0, %s120
      %s137 = sphi 0, %s121
      %s141 = sphi 0, %s141
      %s143 = sphi 0, %s141
      %s144 = sphi 0, %s143
      %s158 = sphi 0, %s144
      %s162 = sphi 0, %s162
      %s164 = sphi 0, %s162
      %s165 = sphi 0, %s164
      %s179 = sphi 0, %s165
      %s183 = sphi 0, %s183
      %s185 = sphi 0, %s183
      %s186 = sphi 0, %s185
      %s200 = sphi 0, %s186
      %s204 = sphi 0, %s204
      %s206 = sphi 0, %s204
      %s207 = sphi 0, %s206
      %s221 = sphi 0, %s207
      %s229 = sphi 0, %s231
      %s232 = sphi 0, %s229
      %s233 = sphi 0, %s232
      %s249 = sphi 0, %s233
      %s257 = sphi 0, %s259
      %s260 = sphi 0, %s257
      %s261 = sphi 0, %s260
      %s277 = sphi 0, %s261
    $region4: #{tpu_custom_call.1} parent=1 // loop_header_branch
      %24 = sbr.rel (%p22) target = $region8
    $region5: #{tpu_custom_call.1} parent=1 // loop_body
      %s26 = ssub.s32 %s21, 1
      %s27 = ssub.s32 %s21, 2
      %s34 = sadd.s32 1, %s29
      %p35 = scmp.ge.s32.totalorder %s34, 2
      %s36 = scalar_select %p35, 0, %s34
      %s37 = sadd.s32 1, %s28
      %s38 = scalar_select %p35, %s37, %s28
      %p39 = scmp.ge.s32.totalorder %s38, 2
      %s40 = scalar_select %p39, 0, %s38
      %s41 = ssub.s32 %s28, %s40
      %s42 = ssub.s32 %s29, %s36
      %s43 = sor.u32 %s41, %s42
      %p44 = scmp.eq.s32.totalorder %s43, 0
      %s46 = sadd.s32 %s45, 1
      %s47 = scalar_select %p44, %s45, %s46
      %p50 = pneg %p44
      %p51 = scmp.eq.s32.totalorder %s21, 3
      %p52 = por %p50, %p51
      %p53 = scmp.ne.s32.totalorder %s45, %s48
      %p54 = scmp.eq.s32.totalorder %s21, 0
      %p55 = por %p53, %p54
      %p56 = scmp.ne.s32.totalorder %s45, %s48
      %p57 = scmp.eq.s32.totalorder %s26, 3
      %p58 = por %p56, %p57
      %p59 = scmp.ne.s32.totalorder %s48, %s49
      %p60 = scmp.eq.s32.totalorder %s26, 0
      %p61 = por %p59, %p60
      %p62 = scmp.ne.s32.totalorder %s48, %s49
      %p63 = scmp.eq.s32.totalorder %s27, 3
      %p64 = por %p62, %p63
      %p66 = scmp.ne.s32.totalorder %s49, %s65
      %p67 = scmp.eq.s32.totalorder %s27, 0
      %p68 = por %p66, %p67
      %s69 = smul.u32 %s29, 8
      %s70 = ssub.s32 %s69, 1
      %p71 = scmp.gt.s32.totalorder %s70, 0
      %s72 = scalar_select %p71, %s70, 0
      %s73 = smul.u32 %s36, 8
      %s74 = ssub.s32 %s73, 1
      %p75 = scmp.gt.s32.totalorder %s74, 0
      %s76 = scalar_select %p75, %s74, 0
      %s77 = ssub.s32 %s28, %s40
      %s78 = ssub.s32 %s72, %s76
      %s79 = sor.u32 %s77, %s78
      %p80 = scmp.eq.s32.totalorder %s79, 0
      %s82 = sadd.s32 %s81, 1
      %s83 = scalar_select %p80, %s81, %s82
      %p86 = pneg %p80
      %p87 = scmp.eq.s32.totalorder %s21, 3
      %p88 = por %p86, %p87
      %p89 = scmp.ne.s32.totalorder %s81, %s84
      %p90 = scmp.eq.s32.totalorder %s21, 0
      %p91 = por %p89, %p90
      %p92 = scmp.ne.s32.totalorder %s81, %s84
      %p93 = scmp.eq.s32.totalorder %s26, 3
      %p94 = por %p92, %p93
      %p95 = scmp.ne.s32.totalorder %s84, %s85
      %p96 = scmp.eq.s32.totalorder %s26, 0
      %p97 = por %p95, %p96
      %p98 = scmp.ne.s32.totalorder %s84, %s85
      %p99 = scmp.eq.s32.totalorder %s27, 3
      %p100 = por %p98, %p99
      %p102 = scmp.ne.s32.totalorder %s85, %s101
      %p103 = scmp.eq.s32.totalorder %s27, 0
      %p104 = por %p102, %p103
      %s105 = smul.u32 %s29, 8
      %s106 = sadd.s32 %s105, 8
      %p107 = scmp.lt.s32.totalorder %s106, 15
      %s108 = scalar_select %p107, %s106, 15
      %s109 = smul.u32 %s36, 8
      %s110 = sadd.s32 %s109, 8
      %p111 = scmp.lt.s32.totalorder %s110, 15
      %s112 = scalar_select %p111, %s110, 15
      %s113 = ssub.s32 %s28, %s40
      %s114 = ssub.s32 %s108, %s112
      %s115 = sor.u32 %s113, %s114
      %p116 = scmp.eq.s32.totalorder %s115, 0
      %s118 = sadd.s32 %s117, 1
      %s119 = scalar_select %p116, %s117, %s118
      %p122 = pneg %p116
      %p123 = scmp.eq.s32.totalorder %s21, 3
      %p124 = por %p122, %p123
      %p125 = scmp.ne.s32.totalorder %s117, %s120
      %p126 = scmp.eq.s32.totalorder %s21, 0
      %p127 = por %p125, %p126
      %p128 = scmp.ne.s32.totalorder %s117, %s120
      %p129 = scmp.eq.s32.totalorder %s26, 3
      %p130 = por %p128, %p129
      %p131 = scmp.ne.s32.totalorder %s120, %s121
      %p132 = scmp.eq.s32.totalorder %s26, 0
      %p133 = por %p131, %p132
      %p134 = scmp.ne.s32.totalorder %s120, %s121
      %p135 = scmp.eq.s32.totalorder %s27, 3
      %p136 = por %p134, %p135
      %p138 = scmp.ne.s32.totalorder %s121, %s137
      %p139 = scmp.eq.s32.totalorder %s27, 0
      %p140 = por %p138, %p139
      %s142 = sadd.s32 %s141, 1
      %p145 = scmp.eq.s32.totalorder %s21, 3
      %p146 = scmp.ne.s32.totalorder %s141, %s143
      %p147 = scmp.eq.s32.totalorder %s21, 0
      %p148 = por %p146, %p147
      %p149 = scmp.ne.s32.totalorder %s141, %s143
      %p150 = scmp.eq.s32.totalorder %s26, 3
      %p151 = por %p149, %p150
      %p152 = scmp.ne.s32.totalorder %s143, %s144
      %p153 = scmp.eq.s32.totalorder %s26, 0
      %p154 = por %p152, %p153
      %p155 = scmp.ne.s32.totalorder %s143, %s144
      %p156 = scmp.eq.s32.totalorder %s27, 3
      %p157 = por %p155, %p156
      %p159 = scmp.ne.s32.totalorder %s144, %s158
      %p160 = scmp.eq.s32.totalorder %s27, 0
      %p161 = por %p159, %p160
      %s163 = sadd.s32 %s162, 1
      %p166 = scmp.eq.s32.totalorder %s21, 3
      %p167 = scmp.ne.s32.totalorder %s162, %s164
      %p168 = scmp.eq.s32.totalorder %s21, 0
      %p169 = por %p167, %p168
      %p170 = scmp.ne.s32.totalorder %s162, %s164
      %p171 = scmp.eq.s32.totalorder %s26, 3
      %p172 = por %p170, %p171
      %p173 = scmp.ne.s32.totalorder %s164, %s165
      %p174 = scmp.eq.s32.totalorder %s26, 0
      %p175 = por %p173, %p174
      %p176 = scmp.ne.s32.totalorder %s164, %s165
      %p177 = scmp.eq.s32.totalorder %s27, 3
      %p178 = por %p176, %p177
      %p180 = scmp.ne.s32.totalorder %s165, %s179
      %p181 = scmp.eq.s32.totalorder %s27, 0
      %p182 = por %p180, %p181
      %s184 = sadd.s32 %s183, 1
      %p187 = scmp.eq.s32.totalorder %s21, 3
      %p188 = scmp.ne.s32.totalorder %s183, %s185
      %p189 = scmp.eq.s32.totalorder %s21, 0
      %p190 = por %p188, %p189
      %p191 = scmp.ne.s32.totalorder %s183, %s185
      %p192 = scmp.eq.s32.totalorder %s26, 3
      %p193 = por %p191, %p192
      %p194 = scmp.ne.s32.totalorder %s185, %s186
      %p195 = scmp.eq.s32.totalorder %s26, 0
      %p196 = por %p194, %p195
      %p197 = scmp.ne.s32.totalorder %s185, %s186
      %p198 = scmp.eq.s32.totalorder %s27, 3
      %p199 = por %p197, %p198
      %p201 = scmp.ne.s32.totalorder %s186, %s200
      %p202 = scmp.eq.s32.totalorder %s27, 0
      %p203 = por %p201, %p202
      %s205 = sadd.s32 %s204, 1
      %p208 = scmp.eq.s32.totalorder %s21, 3
      %p209 = scmp.ne.s32.totalorder %s204, %s206
      %p210 = scmp.eq.s32.totalorder %s21, 0
      %p211 = por %p209, %p210
      %p212 = scmp.ne.s32.totalorder %s204, %s206
      %p213 = scmp.eq.s32.totalorder %s26, 3
      %p214 = por %p212, %p213
      %p215 = scmp.ne.s32.totalorder %s206, %s207
      %p216 = scmp.eq.s32.totalorder %s26, 0
      %p217 = por %p215, %p216
      %p218 = scmp.ne.s32.totalorder %s206, %s207
      %p219 = scmp.eq.s32.totalorder %s27, 3
      %p220 = por %p218, %p219
      %p222 = scmp.ne.s32.totalorder %s207, %s221
      %p223 = scmp.eq.s32.totalorder %s27, 0
      %p224 = por %p222, %p223
      %s225 = ssub.s32 %s28, %s40
      %s226 = ssub.s32 %s29, %s36
      %s227 = sor.u32 %s225, %s226
      %p228 = scmp.eq.s32.totalorder %s227, 0
      %s230 = sadd.s32 %s229, 1
      %s231 = scalar_select %p228, %s229, %s230
      %p234 = pneg %p228
      %p235 = scmp.eq.s32.totalorder %s21, 3
      %p236 = por %p234, %p235
      %p237 = scmp.ne.s32.totalorder %s229, %s232
      %p238 = scmp.eq.s32.totalorder %s21, 0
      %p239 = por %p237, %p238
      %p240 = scmp.ne.s32.totalorder %s229, %s232
      %p241 = scmp.eq.s32.totalorder %s26, 3
      %p242 = por %p240, %p241
      %p243 = scmp.ne.s32.totalorder %s232, %s233
      %p244 = scmp.eq.s32.totalorder %s26, 0
      %p245 = por %p243, %p244
      %p246 = scmp.ne.s32.totalorder %s232, %s233
      %p247 = scmp.eq.s32.totalorder %s27, 3
      %p248 = por %p246, %p247
      %p250 = scmp.ne.s32.totalorder %s233, %s249
      %p251 = scmp.eq.s32.totalorder %s27, 0
      %p252 = por %p250, %p251
      %s253 = ssub.s32 %s28, %s40
      %s254 = ssub.s32 %s29, %s36
      %s255 = sor.u32 %s253, %s254
      %p256 = scmp.eq.s32.totalorder %s255, 0
      %s258 = sadd.s32 %s257, 1
      %s259 = scalar_select %p256, %s257, %s258
      %p262 = pneg %p256
      %p263 = scmp.eq.s32.totalorder %s21, 3
      %p264 = por %p262, %p263
      %p265 = scmp.ne.s32.totalorder %s257, %s260
      %p266 = scmp.eq.s32.totalorder %s21, 0
      %p267 = por %p265, %p266
      %p268 = scmp.ne.s32.totalorder %s257, %s260
      %p269 = scmp.eq.s32.totalorder %s26, 3
      %p270 = por %p268, %p269
      %p271 = scmp.ne.s32.totalorder %s260, %s261
      %p272 = scmp.eq.s32.totalorder %s26, 0
      %p273 = por %p271, %p272
      %p274 = scmp.ne.s32.totalorder %s260, %s261
      %p275 = scmp.eq.s32.totalorder %s27, 3
      %p276 = por %p274, %p275
      %p278 = scmp.ne.s32.totalorder %s261, %s277
      %p279 = scmp.eq.s32.totalorder %s27, 0
      %p280 = por %p278, %p279
      %p281 = scmp.le.s32.totalorder 1, %s21
      %p282 = scmp.lt.s32.totalorder %s21, 5
      %p283 = pnand %p281, %p282
      %p284 = pneg %p283
      // Predicated region
      $region9: #{tpu_custom_call.1} parent=5 // pred_check
        _
      $region10: #{tpu_custom_call.1} parent=5 // pred_check_branch
        %286 = sbr.rel (%p283) target = $region12
      $region11: #{tpu_custom_call.1} parent=5 // pred_region
        %s287 = ssub.s32 %s21, 1
        // Predicated region
        $region13: #{tpu_custom_call.1} parent=11 // pred_check
          %p288 = pneg %p154
        $region14: #{tpu_custom_call.1} parent=11 // pred_check_branch
          %290 = sbr.rel (%p288) target = $region16
        $region15: #{tpu_custom_call.1} parent=11 // pred_region
          _
        $region16: #{tpu_custom_call.1} parent=11 // pred_fallthru
          _
        // Predicated region
        $region17: #{tpu_custom_call.1} parent=11 // pred_check
          %p291 = pneg %p175
        $region18: #{tpu_custom_call.1} parent=11 // pred_check_branch
          %293 = sbr.rel (%p291) target = $region20
        $region19: #{tpu_custom_call.1} parent=11 // pred_region
          _
        $region20: #{tpu_custom_call.1} parent=11 // pred_fallthru
          _
        // Predicated region
        $region21: #{tpu_custom_call.1} parent=11 // pred_check
          %p294 = pneg %p196
        $region22: #{tpu_custom_call.1} parent=11 // pred_check_branch
          %296 = sbr.rel (%p294) target = $region24
        $region23: #{tpu_custom_call.1} parent=11 // pred_region
          _
        $region24: #{tpu_custom_call.1} parent=11 // pred_fallthru
          _
        // Predicated region
        $region25: #{tpu_custom_call.1} parent=11 // pred_check
          %p297 = pneg %p217
        $region26: #{tpu_custom_call.1} parent=11 // pred_check_branch
          %299 = sbr.rel (%p297) target = $region28
        $region27: #{tpu_custom_call.1} parent=11 // pred_region
          _
        $region28: #{tpu_custom_call.1} parent=11 // pred_fallthru
          _
      $region12: #{tpu_custom_call.1} parent=5 // pred_fallthru
        _
      %p300 = scmp.lt.s32.totalorder %s21, 4
      // Predicated region
      $region29: #{tpu_custom_call.1} parent=5 // pred_check
        %p301 = pneg %p300
      $region30: #{tpu_custom_call.1} parent=5 // pred_check_branch
        %303 = sbr.rel (%p301) target = $region32
      $region31: #{tpu_custom_call.1} parent=5 // pred_region
        // Predicated region
        $region33: #{tpu_custom_call.1} parent=31 // pred_check
          %p304 = pneg %p55
        $region34: #{tpu_custom_call.1} parent=31 // pred_check_branch
          %306 = sbr.rel (%p304) target = $region36
        $region35: #{tpu_custom_call.1} parent=31 // pred_region
          %s307 = smul.u32 8, %s29
          %p308 = scmp.lt.s32.totalorder %s28, 1
          %s309 = scalar_select %p308, %s28, 1
          %p310 = scmp.lt.s32.totalorder %s307, 15
          %s311 = scalar_select %p310, %s307, 15
          %s312 = smul.addr %s311, 2
          %s313 = smul.addr %s309, 32
          %s314 = sadd.s32 %s312, %s313
          %s315 = smul.addr %s314, 8
          %s316 = scalar_lea.vmem %s0, %s315
          %s317 = smul.u32 8, %s29
        $region36: #{tpu_custom_call.1} parent=31 // pred_fallthru
          _
        // Predicated region
        $region37: #{tpu_custom_call.1} parent=31 // pred_check
          %p318 = pneg %p91
        $region38: #{tpu_custom_call.1} parent=31 // pred_check_branch
          %320 = sbr.rel (%p318) target = $region40
        $region39: #{tpu_custom_call.1} parent=31 // pred_region
          %s321 = smul.u32 %s29, 8
          %s322 = ssub.s32 %s321, 1
          %p323 = scmp.gt.s32.totalorder %s322, 0
          %s324 = scalar_select %p323, %s322, 0
          %p325 = scmp.lt.s32.totalorder %s28, 1
          %s326 = scalar_select %p325, %s28, 1
          %p327 = scmp.lt.s32.totalorder %s324, 15
          %s328 = scalar_select %p327, %s324, 15
          %s329 = smul.addr %s328, 2
          %s330 = smul.addr %s326, 32
          %s331 = sadd.s32 %s329, %s330
          %s332 = smul.addr %s331, 8
          %s333 = scalar_lea.vmem %s1, %s332
          %s334 = smul.u32 %s29, 8
          %s335 = ssub.s32 %s334, 1
          %p336 = scmp.gt.s32.totalorder %s335, 0
          %s337 = scalar_select %p336, %s335, 0
        $region40: #{tpu_custom_call.1} parent=31 // pred_fallthru
          _
        // Predicated region
        $region41: #{tpu_custom_call.1} parent=31 // pred_check
          %p338 = pneg %p127
        $region42: #{tpu_custom_call.1} parent=31 // pred_check_branch
          %340 = sbr.rel (%p338) target = $region44
        $region43: #{tpu_custom_call.1} parent=31 // pred_region
          %s341 = smul.u32 %s29, 8
          %s342 = sadd.s32 %s341, 8
          %p343 = scmp.lt.s32.totalorder %s342, 15
          %s344 = scalar_select %p343, %s342, 15
          %p345 = scmp.lt.s32.totalorder %s28, 1
          %s346 = scalar_select %p345, %s28, 1
          %p347 = scmp.lt.s32.totalorder %s344, 15
          %s348 = scalar_select %p347, %s344, 15
          %s349 = smul.addr %s348, 2
          %s350 = smul.addr %s346, 32
          %s351 = sadd.s32 %s349, %s350
          %s352 = smul.addr %s351, 8
          %s353 = scalar_lea.vmem %s2, %s352
          %s354 = smul.u32 %s29, 8
          %s355 = sadd.s32 %s354, 8
          %p356 = scmp.lt.s32.totalorder %s355, 15
          %s357 = scalar_select %p356, %s355, 15
        $region44: #{tpu_custom_call.1} parent=31 // pred_fallthru
          _
      $region32: #{tpu_custom_call.1} parent=5 // pred_fallthru
        _
      %p358 = scmp.le.s32.totalorder 1, %s21
      %p359 = scmp.lt.s32.totalorder %s21, 5
      %p360 = pnand %p358, %p359
      %p361 = pneg %p360
      // Predicated region
      $region45: #{tpu_custom_call.1} parent=5 // pred_check
        _
      $region46: #{tpu_custom_call.1} parent=5 // pred_check_branch
        %363 = sbr.rel (%p360) target = $region48
      $region47: #{tpu_custom_call.1} parent=5 // pred_region
        %s364 = ssub.s32 %s21, 1
        %s365 = smul.u32 8, %s31
        %p366 = scmp.lt.s32.totalorder %s30, 1
        %s367 = scalar_select %p366, %s30, 1
        %p368 = scmp.lt.s32.totalorder %s365, 15
        %s369 = scalar_select %p368, %s365, 15
        %s370 = smul.addr %s369, 2
        %s371 = smul.addr %s367, 32
        %s372 = sadd.s32 %s370, %s371
        %s373 = smul.addr %s372, 8
        %s374 = scalar_lea.vmem %s0, %s373
        %p375 = pneg %p61
        %p376 = pneg %p58
        %s377 = smul.u32 %s31, 8
        %s378 = ssub.s32 %s377, 1
        %p379 = scmp.gt.s32.totalorder %s378, 0
        %s380 = scalar_select %p379, %s378, 0
        %p381 = scmp.lt.s32.totalorder %s30, 1
        %s382 = scalar_select %p381, %s30, 1
        %p383 = scmp.lt.s32.totalorder %s380, 15
        %s384 = scalar_select %p383, %s380, 15
        %s385 = smul.addr %s384, 2
        %s386 = smul.addr %s382, 32
        %s387 = sadd.s32 %s385, %s386
        %s388 = smul.addr %s387, 8
        %s389 = scalar_lea.vmem %s1, %s388
        %p390 = pneg %p97
        %p391 = pneg %p94
        %s392 = smul.u32 %s31, 8
        %s393 = sadd.s32 %s392, 8
        %p394 = scmp.lt.s32.totalorder %s393, 15
        %s395 = scalar_select %p394, %s393, 15
        %p396 = scmp.lt.s32.totalorder %s30, 1
        %s397 = scalar_select %p396, %s30, 1
        %p398 = scmp.lt.s32.totalorder %s395, 15
        %s399 = scalar_select %p398, %s395, 15
        %s400 = smul.addr %s399, 2
        %s401 = smul.addr %s397, 32
        %s402 = sadd.s32 %s400, %s401
        %s403 = smul.addr %s402, 8
        %s404 = scalar_lea.vmem %s2, %s403
        %p405 = pneg %p133
        %p406 = pneg %p130
        %p407 = pneg %p154
        %p408 = pneg %p151
        %p409 = pneg %p175
        %p410 = pneg %p172
        %p411 = pneg %p196
        %p412 = pneg %p193
        %p413 = pneg %p217
        %p414 = pneg %p214
        %p415 = pneg %p245
        %p416 = pneg %p242
        %s417 = sand.u32 %s232, 1
        %s418 = scalar_lea.sflag [#allocation4], %s417
        %s419 = sand.u32 %s232, 1
        %s420 = smul.addr %s419, 64
        %s421 = scalar_lea.vmem [#allocation3], %s420
        %p422 = pneg %p273
        %p423 = pneg %p270
        %s424 = sand.u32 %s260, 1
        %s425 = scalar_lea.sflag [#allocation6], %s424
        %s426 = sand.u32 %s260, 1
        %s427 = smul.addr %s426, 2
        %s428 = scalar_lea.vmem [#allocation5], %s427
        %s429 = smul.u32 8, %s31
        %p430 = scmp.lt.s32.totalorder %s30, 1
        %s431 = scalar_select %p430, %s30, 1
        %p432 = scmp.lt.s32.totalorder %s429, 15
        %s433 = scalar_select %p432, %s429, 15
        %s434 = smul.addr %s433, 2
        %s435 = smul.addr %s431, 32
        %s436 = sadd.s32 %s434, %s435
        %s437 = smul.addr %s436, 8
        %s438 = scalar_lea.vmem %s0, %s437
        %s439 = smul.u32 8, %s31
        %s440 = smul.u32 %s31, 8
        %s441 = ssub.s32 %s440, 1
        %p442 = scmp.gt.s32.totalorder %s441, 0
        %s443 = scalar_select %p442, %s441, 0
        %p444 = scmp.lt.s32.totalorder %s30, 1
        %s445 = scalar_select %p444, %s30, 1
        %p446 = scmp.lt.s32.totalorder %s443, 15
        %s447 = scalar_select %p446, %s443, 15
        %s448 = smul.addr %s447, 2
        %s449 = smul.addr %s445, 32
        %s450 = sadd.s32 %s448, %s449
        %s451 = smul.addr %s450, 8
        %s452 = scalar_lea.vmem %s1, %s451
        %s453 = smul.u32 %s31, 8
        %s454 = ssub.s32 %s453, 1
        %p455 = scmp.gt.s32.totalorder %s454, 0
        %s456 = scalar_select %p455, %s454, 0
        %s457 = smul.u32 %s31, 8
        %s458 = sadd.s32 %s457, 8
        %p459 = scmp.lt.s32.totalorder %s458, 15
        %s460 = scalar_select %p459, %s458, 15
        %p461 = scmp.lt.s32.totalorder %s30, 1
        %s462 = scalar_select %p461, %s30, 1
        %p463 = scmp.lt.s32.totalorder %s460, 15
        %s464 = scalar_select %p463, %s460, 15
        %s465 = smul.addr %s464, 2
        %s466 = smul.addr %s462, 32
        %s467 = sadd.s32 %s465, %s466
        %s468 = smul.addr %s467, 8
        %s469 = scalar_lea.vmem %s2, %s468
        %s470 = smul.u32 %s31, 8
        %s471 = sadd.s32 %s470, 8
        %p472 = scmp.lt.s32.totalorder %s471, 15
        %s473 = scalar_select %p472, %s471, 15
        %s474 = smul.u32 8, %s31
        %vm476 = vcmask 24576
        %477 = vst.msk [vmem:[#allocation2 + $0x7] sm:$0x1] %vm476, 0.0
        %478 = vst.msk [vmem:[#allocation2 + $0x27] sm:$0x1] %vm476, 0.0
        %479 = vst.msk [vmem:[#allocation2 + $0x47] sm:$0x1] %vm476, 0.0
        %480 = vst.msk [vmem:[#allocation2 + $0x67] sm:$0x1] %vm476, 0.0
        %481 = vst.msk [vmem:[#allocation2 + $0x87] sm:$0x1] %vm476, 0.0
        %482 = vst.msk [vmem:[#allocation2 + $0xa7] sm:$0x1] %vm476, 0.0
        %483 = vst.msk [vmem:[#allocation2 + $0xc7] sm:$0x1] %vm476, 0.0
        %484 = vst.msk [vmem:[#allocation2 + $0xe7] sm:$0x1] %vm476, 0.0
        %485 = vst.msk [vmem:[#allocation2 + $0x107] sm:$0x1] %vm476, 0.0
        %486 = vst.msk [vmem:[#allocation2 + $0x127] sm:$0x1] %vm476, 0.0
        %487 = vst.msk [vmem:[#allocation2 + $0x18] sm:$0x1] %vm476, 0.0
        %488 = vst.msk [vmem:[#allocation2 + $0x38] sm:$0x1] %vm476, 0.0
        %489 = vst.msk [vmem:[#allocation2 + $0x58] sm:$0x1] %vm476, 0.0
        %490 = vst.msk [vmem:[#allocation2 + $0x78] sm:$0x1] %vm476, 0.0
        %491 = vst.msk [vmem:[#allocation2 + $0x98] sm:$0x1] %vm476, 0.0
        %492 = vst.msk [vmem:[#allocation2 + $0xb8] sm:$0x1] %vm476, 0.0
        %493 = vst.msk [vmem:[#allocation2 + $0xd8] sm:$0x1] %vm476, 0.0
        %494 = vst.msk [vmem:[#allocation2 + $0xf8] sm:$0x1] %vm476, 0.0
        %495 = vst.msk [vmem:[#allocation2 + $0x118] sm:$0x1] %vm476, 0.0
        %496 = vst.msk [vmem:[#allocation2 + $0x138] sm:$0x1] %vm476, 0.0
        %p497 = scmp.gt.s32.totalorder %s31, 0
        %s498 = scalar_select %p497, 1.0, 0.0
        %p499 = scmp.lt.s32.totalorder %s31, 1
        %s500 = scalar_select %p499, 1.0, 0.0
        %v501 = vld [vmem:[%s452] sm:$0xff]
        %v502 = vld [vmem:[%s452 + $0x8] sm:$0xff]
        %v503 = vstv %s498
        %v504 = vmul.f32 %v501, %v503
        %v505 = vmul.f32 %v502, %v503
        %vm506 = vcmask 31744
        %507 = vst.msk [vmem:[#allocation2 + $0x8] sm:$0xff] %vm506, %v504
        %508 = vst.msk [vmem:[#allocation2 + $0x10] sm:$0xff] %vm506, %v505
        %v509 = vld [vmem:[%s438] sm:$0xff]
        %v510 = vld [vmem:[%s438 + $0x8] sm:$0xff]
        %v511 = vld [vmem:[%s438 + $0x10] sm:$0xff]
        %v512 = vld [vmem:[%s438 + $0x18] sm:$0xff]
        %v513 = vld [vmem:[%s438 + $0x20] sm:$0xff]
        %v514 = vld [vmem:[%s438 + $0x28] sm:$0xff]
        %v515 = vld [vmem:[%s438 + $0x30] sm:$0xff]
        %v516 = vld [vmem:[%s438 + $0x38] sm:$0xff]
        %v517 = vld [vmem:[%s438 + $0x40] sm:$0xff]
        %v518 = vld [vmem:[%s438 + $0x48] sm:$0xff]
        %v519 = vld [vmem:[%s438 + $0x50] sm:$0xff]
        %v520 = vld [vmem:[%s438 + $0x58] sm:$0xff]
        %v521 = vld [vmem:[%s438 + $0x60] sm:$0xff]
        %v522 = vld [vmem:[%s438 + $0x68] sm:$0xff]
        %v523 = vld [vmem:[%s438 + $0x70] sm:$0xff]
        %v524 = vld [vmem:[%s438 + $0x78] sm:$0xff]
        %s525 = scalar_lea.vmem [#allocation2], 32
        %526 = vst.msk [vmem:[%s525 + $0x8] sm:$0xff] %vm506, %v509
        %527 = vst.msk [vmem:[%s525 + $0x10] sm:$0xff] %vm506, %v510
        %528 = vst.msk [vmem:[%s525 + $0x28] sm:$0xff] %vm506, %v511
        %529 = vst.msk [vmem:[%s525 + $0x30] sm:$0xff] %vm506, %v512
        %530 = vst.msk [vmem:[%s525 + $0x48] sm:$0xff] %vm506, %v513
        %531 = vst.msk [vmem:[%s525 + $0x50] sm:$0xff] %vm506, %v514
        %532 = vst.msk [vmem:[%s525 + $0x68] sm:$0xff] %vm506, %v515
        %533 = vst.msk [vmem:[%s525 + $0x70] sm:$0xff] %vm506, %v516
        %534 = vst.msk [vmem:[%s525 + $0x88] sm:$0xff] %vm506, %v517
        %535 = vst.msk [vmem:[%s525 + $0x90] sm:$0xff] %vm506, %v518
        %536 = vst.msk [vmem:[%s525 + $0xa8] sm:$0xff] %vm506, %v519
        %537 = vst.msk [vmem:[%s525 + $0xb0] sm:$0xff] %vm506, %v520
        %538 = vst.msk [vmem:[%s525 + $0xc8] sm:$0xff] %vm506, %v521
        %539 = vst.msk [vmem:[%s525 + $0xd0] sm:$0xff] %vm506, %v522
        %540 = vst.msk [vmem:[%s525 + $0xe8] sm:$0xff] %vm506, %v523
        %541 = vst.msk [vmem:[%s525 + $0xf0] sm:$0xff] %vm506, %v524
        %v542 = vld [vmem:[%s469] sm:$0xff]
        %v543 = vld [vmem:[%s469 + $0x8] sm:$0xff]
        %v544 = vstv %s500
        %v545 = vmul.f32 %v542, %v544
        %v546 = vmul.f32 %v543, %v544
        %s547 = scalar_lea.vmem [#allocation2], 288
        %548 = vst.msk [vmem:[%s547 + $0x8] sm:$0xff] %vm506, %v545
        %549 = vst.msk [vmem:[%s547 + $0x10] sm:$0xff] %vm506, %v546
        %v550 = vld [vmem:[#allocation2 + $0x7] sm:$0xff]
        %v551 = vld [vmem:[#allocation2 + $0xf] sm:$0xff]
        %v552 = vld [vmem:[#allocation2 + $0x27] sm:$0xff]
        %v553 = vld [vmem:[#allocation2 + $0x2f] sm:$0xff]
        %v554 = vld [vmem:[#allocation2 + $0x47] sm:$0xff]
        %v555 = vld [vmem:[#allocation2 + $0x4f] sm:$0xff]
        %v556 = vld [vmem:[#allocation2 + $0x67] sm:$0xff]
        %v557 = vld [vmem:[#allocation2 + $0x6f] sm:$0xff]
        %v558 = vld [vmem:[#allocation2 + $0x87] sm:$0xff]
        %v559 = vld [vmem:[#allocation2 + $0x8f] sm:$0xff]
        %v560 = vld [vmem:[#allocation2 + $0xa7] sm:$0xff]
        %v561 = vld [vmem:[#allocation2 + $0xaf] sm:$0xff]
        %v562 = vld [vmem:[#allocation2 + $0xc7] sm:$0xff]
        %v563 = vld [vmem:[#allocation2 + $0xcf] sm:$0xff]
        %v564 = vld [vmem:[#allocation2 + $0xe7] sm:$0xff]
        %v565 = vld [vmem:[#allocation2 + $0xef] sm:$0xff]
        %v566 = vpack.c.bf16 %v551, %v550
        %v567 = vpack.c.bf16 %v553, %v552
        %v568 = vpack.c.bf16 %v555, %v554
        %v569 = vpack.c.bf16 %v557, %v556
        %v570 = vpack.c.bf16 %v559, %v558
        %v571 = vpack.c.bf16 %v561, %v560
        %v572 = vpack.c.bf16 %v563, %v562
        %v573 = vpack.c.bf16 %v565, %v564
        %v574 = vld [vmem:[%s5] sm:$0x3]
        %v575 = vld [vmem:[#allocation2 + $0x8] sm:$0xff]
        %v576 = vld [vmem:[#allocation2 + $0x10] sm:$0xff]
        %v577 = vld [vmem:[#allocation2 + $0x28] sm:$0xff]
        %v578 = vld [vmem:[#allocation2 + $0x30] sm:$0xff]
        %v579 = vld [vmem:[#allocation2 + $0x48] sm:$0xff]
        %v580 = vld [vmem:[#allocation2 + $0x50] sm:$0xff]
        %v581 = vld [vmem:[#allocation2 + $0x68] sm:$0xff]
        %v582 = vld [vmem:[#allocation2 + $0x70] sm:$0xff]
        %v583 = vld [vmem:[#allocation2 + $0x88] sm:$0xff]
        %v584 = vld [vmem:[#allocation2 + $0x90] sm:$0xff]
        %v585 = vld [vmem:[#allocation2 + $0xa8] sm:$0xff]
        %v586 = vld [vmem:[#allocation2 + $0xb0] sm:$0xff]
        %v587 = vld [vmem:[#allocation2 + $0xc8] sm:$0xff]
        %v588 = vld [vmem:[#allocation2 + $0xd0] sm:$0xff]
        %v589 = vld [vmem:[#allocation2 + $0xe8] sm:$0xff]
        %v590 = vld [vmem:[#allocation2 + $0xf0] sm:$0xff]
        %v591 = vpack.c.bf16 %v576, %v575
        %v592 = vpack.c.bf16 %v578, %v577
        %v593 = vpack.c.bf16 %v580, %v579
        %v594 = vpack.c.bf16 %v582, %v581
        %v595 = vpack.c.bf16 %v584, %v583
        %v596 = vpack.c.bf16 %v586, %v585
        %v597 = vpack.c.bf16 %v588, %v587
        %v598 = vpack.c.bf16 %v590, %v589
        %s599 = scalar_lea.vmem %s5, 2
        %v600 = vld [vmem:[%s599] sm:$0x3]
        %v602 = vsel %vm506, %v591, 0
        %v605 = vsel %vm506, %v592, 0
        %v608 = vsel %vm506, %v593, 0
        %v611 = vsel %vm506, %v594, 0
        %v614 = vsel %vm506, %v595, 0
        %v617 = vsel %vm506, %v596, 0
        %v620 = vsel %vm506, %v597, 0
        %v623 = vsel %vm506, %v598, 0
        %vm625 = vcmask 1041408
        %v627 = vsel %vm625, %v600, 0
        %629 = vmatprep.subr.bf16.mxu0 0
        %630 = vmatpush1.bf16.msra.mxu0 %v627
        %631 = vmatprep.subr.bf16.mxu0 0
        %632 = vmatpush1.bf16.msra.mxu0 0
        %633 = vmatprep.subr.bf16.mxu0 0
        %634 = vmatpush1.bf16.msra.mxu0 0
        %635 = vmatprep.subr.bf16.mxu0 0
        %636 = vmatpush1.bf16.msra.mxu0 0
        %637 = vmatprep.subr.bf16.mxu0 0
        %638 = vmatpush1.bf16.msra.mxu0 0
        %639 = vmatprep.subr.bf16.mxu0 0
        %640 = vmatpush1.bf16.msra.mxu0 0
        %641 = vmatprep.subr.bf16.mxu0 0
        %642 = vmatpush1.bf16.msra.mxu0 0
        %643 = vmatprep.subr.bf16.mxu0 0
        %644 = vmatpush1.bf16.msra.mxu0 0
        %645 = vmatprep.subr.bf16.mxu0 0
        %646 = vmatpush1.bf16.msra.mxu0 0
        %647 = vmatprep.subr.bf16.mxu0 0
        %648 = vmatpush1.bf16.msra.mxu0 0
        %649 = vmatprep.subr.bf16.mxu0 0
        %650 = vmatpush1.bf16.msra.mxu0 0
        %651 = vmatprep.subr.bf16.mxu0 0
        %652 = vmatpush1.bf16.msra.mxu0 0
        %653 = vmatprep.subr.bf16.mxu0 0
        %654 = vmatpush1.bf16.msra.mxu0 0
        %655 = vmatprep.subr.bf16.mxu0 0
        %656 = vmatpush1.bf16.msra.mxu0 0
        %657 = vmatprep.subr.bf16.mxu0 0
        %658 = vmatpush1.bf16.msra.mxu0 0
        %659 = vmatprep.subr.bf16.mxu0 0
        %660 = vmatpush1.bf16.msra.mxu0 0
        %661 = vmatprep.mubr.bf16.mxu0 0
        %662 = vmatmul.mubr.bf16.gmra.mrb[0].mxu0 %v602
        %v663 = vpop.f32.mrb[0].mxu0
        %v664 = vadd.f32 0.0, %v663
        %v665 = vpop.f32.mrb[0].mxu0
        %v666 = vpop.f32.mrb[0].mxu0
        %v667 = vadd.f32 0.0, %v666
        %v668 = vpop.f32.mrb[0].mxu0
        %669 = vmatprep.mubr.bf16.mxu0 0
        %670 = vmatmul.mubr.bf16.gmra.mrb[0].mxu0 %v605
        %v671 = vpop.f32.mrb[0].mxu0
        %v672 = vadd.f32 0.0, %v671
        %v673 = vpop.f32.mrb[0].mxu0
        %v674 = vpop.f32.mrb[0].mxu0
        %v675 = vadd.f32 0.0, %v674
        %v676 = vpop.f32.mrb[0].mxu0
        %677 = vmatprep.mubr.bf16.mxu0 0
        %678 = vmatmul.mubr.bf16.gmra.mrb[0].mxu0 %v608
        %v679 = vpop.f32.mrb[0].mxu0
        %v680 = vadd.f32 0.0, %v679
        %v681 = vpop.f32.mrb[0].mxu0
        %v682 = vpop.f32.mrb[0].mxu0
        %v683 = vadd.f32 0.0, %v682
        %v684 = vpop.f32.mrb[0].mxu0
        %685 = vmatprep.mubr.bf16.mxu0 0
        %686 = vmatmul.mubr.bf16.gmra.mrb[0].mxu0 %v611
        %v687 = vpop.f32.mrb[0].mxu0
        %v688 = vadd.f32 0.0, %v687
        %v689 = vpop.f32.mrb[0].mxu0
        %v690 = vpop.f32.mrb[0].mxu0
        %v691 = vadd.f32 0.0, %v690
        %v692 = vpop.f32.mrb[0].mxu0
        %693 = vmatprep.mubr.bf16.mxu0 0
        %694 = vmatmul.mubr.bf16.gmra.mrb[0].mxu0 %v614
        %v695 = vpop.f32.mrb[0].mxu0
        %v696 = vadd.f32 0.0, %v695
        %v697 = vpop.f32.mrb[0].mxu0
        %v698 = vpop.f32.mrb[0].mxu0
        %v699 = vadd.f32 0.0, %v698
        %v700 = vpop.f32.mrb[0].mxu0
        %701 = vmatprep.mubr.bf16.mxu0 0
        %702 = vmatmul.mubr.bf16.gmra.mrb[0].mxu0 %v617
        %v703 = vpop.f32.mrb[0].mxu0
        %v704 = vadd.f32 0.0, %v703
        %v705 = vpop.f32.mrb[0].mxu0
        %v706 = vpop.f32.mrb[0].mxu0
        %v707 = vadd.f32 0.0, %v706
        %v708 = vpop.f32.mrb[0].mxu0
        %709 = vmatprep.mubr.bf16.mxu0 0
        %710 = vmatmul.mubr.bf16.gmra.mrb[0].mxu0 %v620
        %v711 = vpop.f32.mrb[0].mxu0
        %v712 = vadd.f32 0.0, %v711
        %v713 = vpop.f32.mrb[0].mxu0
        %v714 = vpop.f32.mrb[0].mxu0
        %v715 = vadd.f32 0.0, %v714
        %v716 = vpop.f32.mrb[0].mxu0
        %717 = vmatprep.mubr.bf16.mxu0 0
        %718 = vmatmul.mubr.bf16.gmra.mrb[0].mxu0 %v623
        %v719 = vpop.f32.mrb[0].mxu0
        %v720 = vadd.f32 0.0, %v719
        %v721 = vpop.f32.mrb[0].mxu0
        %v722 = vpop.f32.mrb[0].mxu0
        %v723 = vadd.f32 0.0, %v722
        %v724 = vpop.f32.mrb[0].mxu0
        %725 = vdwg.mxu0
        %v727 = vsel %vm506, %v566, 0
        %v730 = vsel %vm506, %v567, 0
        %v733 = vsel %vm506, %v568, 0
        %v736 = vsel %vm506, %v569, 0
        %v739 = vsel %vm506, %v570, 0
        %v742 = vsel %vm506, %v571, 0
        %v745 = vsel %vm506, %v572, 0
        %v748 = vsel %vm506, %v573, 0
        %v751 = vsel %vm625, %v574, 0
        %753 = vmatprep.subr.bf16.mxu0 0
        %754 = vmatpush1.bf16.msra.mxu0 %v751
        %755 = vmatprep.subr.bf16.mxu0 0
        %756 = vmatpush1.bf16.msra.mxu0 0
        %757 = vmatprep.subr.bf16.mxu0 0
        %758 = vmatpush1.bf16.msra.mxu0 0
        %759 = vmatprep.subr.bf16.mxu0 0
        %760 = vmatpush1.bf16.msra.mxu0 0
        %761 = vmatprep.subr.bf16.mxu0 0
        %762 = vmatpush1.bf16.msra.mxu0 0
        %763 = vmatprep.subr.bf16.mxu0 0
        %764 = vmatpush1.bf16.msra.mxu0 0
        %765 = vmatprep.subr.bf16.mxu0 0
        %766 = vmatpush1.bf16.msra.mxu0 0
        %767 = vmatprep.subr.bf16.mxu0 0
        %768 = vmatpush1.bf16.msra.mxu0 0
        %769 = vmatprep.subr.bf16.mxu0 0
        %770 = vmatpush1.bf16.msra.mxu0 0
        %771 = vmatprep.subr.bf16.mxu0 0
        %772 = vmatpush1.bf16.msra.mxu0 0
        %773 = vmatprep.subr.bf16.mxu0 0
        %774 = vmatpush1.bf16.msra.mxu0 0
        %775 = vmatprep.subr.bf16.mxu0 0
        %776 = vmatpush1.bf16.msra.mxu0 0
        %777 = vmatprep.subr.bf16.mxu0 0
        %778 = vmatpush1.bf16.msra.mxu0 0
        %779 = vmatprep.subr.bf16.mxu0 0
        %780 = vmatpush1.bf16.msra.mxu0 0
        %781 = vmatprep.subr.bf16.mxu0 0
        %782 = vmatpush1.bf16.msra.mxu0 0
        %783 = vmatprep.subr.bf16.mxu0 0
        %784 = vmatpush1.bf16.msra.mxu0 0
        %785 = vmatprep.mubr.bf16.mxu0 0
        %786 = vmatmul.mubr.bf16.gmra.mrb[0].mxu0 %v727
        %v787 = vpop.f32.mrb[0].mxu0
        %v788 = vadd.f32 %v664, %v787
        %v789 = vpop.f32.mrb[0].mxu0
        %v790 = vpop.f32.mrb[0].mxu0
        %v791 = vadd.f32 %v667, %v790
        %v792 = vpop.f32.mrb[0].mxu0
        %793 = vmatprep.mubr.bf16.mxu0 0
        %794 = vmatmul.mubr.bf16.gmra.mrb[0].mxu0 %v730
        %v795 = vpop.f32.mrb[0].mxu0
        %v796 = vadd.f32 %v672, %v795
        %v797 = vpop.f32.mrb[0].mxu0
        %v798 = vpop.f32.mrb[0].mxu0
        %v799 = vadd.f32 %v675, %v798
        %v800 = vpop.f32.mrb[0].mxu0
        %801 = vmatprep.mubr.bf16.mxu0 0
        %802 = vmatmul.mubr.bf16.gmra.mrb[0].mxu0 %v733
        %v803 = vpop.f32.mrb[0].mxu0
        %v804 = vadd.f32 %v680, %v803
        %v805 = vpop.f32.mrb[0].mxu0
        %v806 = vpop.f32.mrb[0].mxu0
        %v807 = vadd.f32 %v683, %v806
        %v808 = vpop.f32.mrb[0].mxu0
        %809 = vmatprep.mubr.bf16.mxu0 0
        %810 = vmatmul.mubr.bf16.gmra.mrb[0].mxu0 %v736
        %v811 = vpop.f32.mrb[0].mxu0
        %v812 = vadd.f32 %v688, %v811
        %v813 = vpop.f32.mrb[0].mxu0
        %v814 = vpop.f32.mrb[0].mxu0
        %v815 = vadd.f32 %v691, %v814
        %v816 = vpop.f32.mrb[0].mxu0
        %817 = vmatprep.mubr.bf16.mxu0 0
        %818 = vmatmul.mubr.bf16.gmra.mrb[0].mxu0 %v739
        %v819 = vpop.f32.mrb[0].mxu0
        %v820 = vadd.f32 %v696, %v819
        %v821 = vpop.f32.mrb[0].mxu0
        %v822 = vpop.f32.mrb[0].mxu0
        %v823 = vadd.f32 %v699, %v822
        %v824 = vpop.f32.mrb[0].mxu0
        %825 = vmatprep.mubr.bf16.mxu0 0
        %826 = vmatmul.mubr.bf16.gmra.mrb[0].mxu0 %v742
        %v827 = vpop.f32.mrb[0].mxu0
        %v828 = vadd.f32 %v704, %v827
        %v829 = vpop.f32.mrb[0].mxu0
        %v830 = vpop.f32.mrb[0].mxu0
        %v831 = vadd.f32 %v707, %v830
        %v832 = vpop.f32.mrb[0].mxu0
        %833 = vmatprep.mubr.bf16.mxu0 0
        %834 = vmatmul.mubr.bf16.gmra.mrb[0].mxu0 %v745
        %v835 = vpop.f32.mrb[0].mxu0
        %v836 = vadd.f32 %v712, %v835
        %v837 = vpop.f32.mrb[0].mxu0
        %v838 = vpop.f32.mrb[0].mxu0
        %v839 = vadd.f32 %v715, %v838
        %v840 = vpop.f32.mrb[0].mxu0
        %841 = vmatprep.mubr.bf16.mxu0 0
        %842 = vmatmul.mubr.bf16.gmra.mrb[0].mxu0 %v748
        %v843 = vpop.f32.mrb[0].mxu0
        %v844 = vadd.f32 %v720, %v843
        %v845 = vpop.f32.mrb[0].mxu0
        %v846 = vpop.f32.mrb[0].mxu0
        %v847 = vadd.f32 %v723, %v846
        %v848 = vpop.f32.mrb[0].mxu0
        %849 = vdwg.mxu0
        %v850 = vld [vmem:[#allocation2 + $0x9] sm:$0xff]
        %v851 = vld [vmem:[#allocation2 + $0x11] sm:$0xff]
        %v852 = vld [vmem:[#allocation2 + $0x29] sm:$0xff]
        %v853 = vld [vmem:[#allocation2 + $0x31] sm:$0xff]
        %v854 = vld [vmem:[#allocation2 + $0x49] sm:$0xff]
        %v855 = vld [vmem:[#allocation2 + $0x51] sm:$0xff]
        %v856 = vld [vmem:[#allocation2 + $0x69] sm:$0xff]
        %v857 = vld [vmem:[#allocation2 + $0x71] sm:$0xff]
        %v858 = vld [vmem:[#allocation2 + $0x89] sm:$0xff]
        %v859 = vld [vmem:[#allocation2 + $0x91] sm:$0xff]
        %v860 = vld [vmem:[#allocation2 + $0xa9] sm:$0xff]
        %v861 = vld [vmem:[#allocation2 + $0xb1] sm:$0xff]
        %v862 = vld [vmem:[#allocation2 + $0xc9] sm:$0xff]
        %v863 = vld [vmem:[#allocation2 + $0xd1] sm:$0xff]
        %v864 = vld [vmem:[#allocation2 + $0xe9] sm:$0xff]
        %v865 = vld [vmem:[#allocation2 + $0xf1] sm:$0xff]
        %v866 = vpack.c.bf16 %v851, %v850
        %v867 = vpack.c.bf16 %v853, %v852
        %v868 = vpack.c.bf16 %v855, %v854
        %v869 = vpack.c.bf16 %v857, %v856
        %v870 = vpack.c.bf16 %v859, %v858
        %v871 = vpack.c.bf16 %v861, %v860
        %v872 = vpack.c.bf16 %v863, %v862
        %v873 = vpack.c.bf16 %v865, %v864
        %s874 = scalar_lea.vmem %s5, 4
        %v875 = vld [vmem:[%s874] sm:$0x3]
        %v877 = vsel %vm506, %v866, 0
        %v880 = vsel %vm506, %v867, 0
        %v883 = vsel %vm506, %v868, 0
        %v886 = vsel %vm506, %v869, 0
        %v889 = vsel %vm506, %v870, 0
        %v892 = vsel %vm506, %v871, 0
        %v895 = vsel %vm506, %v872, 0
        %v898 = vsel %vm506, %v873, 0
        %v901 = vsel %vm625, %v875, 0
        %903 = vmatprep.subr.bf16.mxu0 0
        %904 = vmatpush1.bf16.msra.mxu0 %v901
        %905 = vmatprep.subr.bf16.mxu0 0
        %906 = vmatpush1.bf16.msra.mxu0 0
        %907 = vmatprep.subr.bf16.mxu0 0
        %908 = vmatpush1.bf16.msra.mxu0 0
        %909 = vmatprep.subr.bf16.mxu0 0
        %910 = vmatpush1.bf16.msra.mxu0 0
        %911 = vmatprep.subr.bf16.mxu0 0
        %912 = vmatpush1.bf16.msra.mxu0 0
        %913 = vmatprep.subr.bf16.mxu0 0
        %914 = vmatpush1.bf16.msra.mxu0 0
        %915 = vmatprep.subr.bf16.mxu0 0
        %916 = vmatpush1.bf16.msra.mxu0 0
        %917 = vmatprep.subr.bf16.mxu0 0
        %918 = vmatpush1.bf16.msra.mxu0 0
        %919 = vmatprep.subr.bf16.mxu0 0
        %920 = vmatpush1.bf16.msra.mxu0 0
        %921 = vmatprep.subr.bf16.mxu0 0
        %922 = vmatpush1.bf16.msra.mxu0 0
        %923 = vmatprep.subr.bf16.mxu0 0
        %924 = vmatpush1.bf16.msra.mxu0 0
        %925 = vmatprep.subr.bf16.mxu0 0
        %926 = vmatpush1.bf16.msra.mxu0 0
        %927 = vmatprep.subr.bf16.mxu0 0
        %928 = vmatpush1.bf16.msra.mxu0 0
        %929 = vmatprep.subr.bf16.mxu0 0
        %930 = vmatpush1.bf16.msra.mxu0 0
        %931 = vmatprep.subr.bf16.mxu0 0
        %932 = vmatpush1.bf16.msra.mxu0 0
        %933 = vmatprep.subr.bf16.mxu0 0
        %934 = vmatpush1.bf16.msra.mxu0 0
        %935 = vmatprep.mubr.bf16.mxu0 0
        %936 = vmatmul.mubr.bf16.gmra.mrb[0].mxu0 %v877
        %v937 = vpop.f32.mrb[0].mxu0
        %v938 = vadd.f32 0.0, %v937
        %v939 = vpop.f32.mrb[0].mxu0
        %v940 = vpop.f32.mrb[0].mxu0
        %v941 = vadd.f32 0.0, %v940
        %v942 = vpop.f32.mrb[0].mxu0
        %943 = vmatprep.mubr.bf16.mxu0 0
        %944 = vmatmul.mubr.bf16.gmra.mrb[0].mxu0 %v880
        %v945 = vpop.f32.mrb[0].mxu0
        %v946 = vadd.f32 0.0, %v945
        %v947 = vpop.f32.mrb[0].mxu0
        %v948 = vpop.f32.mrb[0].mxu0
        %v949 = vadd.f32 0.0, %v948
        %v950 = vpop.f32.mrb[0].mxu0
        %951 = vmatprep.mubr.bf16.mxu0 0
        %952 = vmatmul.mubr.bf16.gmra.mrb[0].mxu0 %v883
        %v953 = vpop.f32.mrb[0].mxu0
        %v954 = vadd.f32 0.0, %v953
        %v955 = vpop.f32.mrb[0].mxu0
        %v956 = vpop.f32.mrb[0].mxu0
        %v957 = vadd.f32 0.0, %v956
        %v958 = vpop.f32.mrb[0].mxu0
        %959 = vmatprep.mubr.bf16.mxu0 0
        %960 = vmatmul.mubr.bf16.gmra.mrb[0].mxu0 %v886
        %v961 = vpop.f32.mrb[0].mxu0
        %v962 = vadd.f32 0.0, %v961
        %v963 = vpop.f32.mrb[0].mxu0
        %v964 = vpop.f32.mrb[0].mxu0
        %v965 = vadd.f32 0.0, %v964
        %v966 = vpop.f32.mrb[0].mxu0
        %967 = vmatprep.mubr.bf16.mxu0 0
        %968 = vmatmul.mubr.bf16.gmra.mrb[0].mxu0 %v889
        %v969 = vpop.f32.mrb[0].mxu0
        %v970 = vadd.f32 0.0, %v969
        %v971 = vpop.f32.mrb[0].mxu0
        %v972 = vpop.f32.mrb[0].mxu0
        %v973 = vadd.f32 0.0, %v972
        %v974 = vpop.f32.mrb[0].mxu0
        %975 = vmatprep.mubr.bf16.mxu0 0
        %976 = vmatmul.mubr.bf16.gmra.mrb[0].mxu0 %v892
        %v977 = vpop.f32.mrb[0].mxu0
        %v978 = vadd.f32 0.0, %v977
        %v979 = vpop.f32.mrb[0].mxu0
        %v980 = vpop.f32.mrb[0].mxu0
        %v981 = vadd.f32 0.0, %v980
        %v982 = vpop.f32.mrb[0].mxu0
        %983 = vmatprep.mubr.bf16.mxu0 0
        %984 = vmatmul.mubr.bf16.gmra.mrb[0].mxu0 %v895
        %v985 = vpop.f32.mrb[0].mxu0
        %v986 = vadd.f32 0.0, %v985
        %v987 = vpop.f32.mrb[0].mxu0
        %v988 = vpop.f32.mrb[0].mxu0
        %v989 = vadd.f32 0.0, %v988
        %v990 = vpop.f32.mrb[0].mxu0
        %991 = vmatprep.mubr.bf16.mxu0 0
        %992 = vmatmul.mubr.bf16.gmra.mrb[0].mxu0 %v898
        %v993 = vpop.f32.mrb[0].mxu0
        %v994 = vadd.f32 0.0, %v993
        %v995 = vpop.f32.mrb[0].mxu0
        %v996 = vpop.f32.mrb[0].mxu0
        %v997 = vadd.f32 0.0, %v996
        %v998 = vpop.f32.mrb[0].mxu0
        %999 = vdwg.mxu0
        %v1000 = vadd.f32 %v788, %v938
        %v1001 = vadd.f32 %v791, %v941
        %v1002 = vadd.f32 %v796, %v946
        %v1003 = vadd.f32 %v799, %v949
        %v1004 = vadd.f32 %v804, %v954
        %v1005 = vadd.f32 %v807, %v957
        %v1006 = vadd.f32 %v812, %v962
        %v1007 = vadd.f32 %v815, %v965
        %v1008 = vadd.f32 %v820, %v970
        %v1009 = vadd.f32 %v823, %v973
        %v1010 = vadd.f32 %v828, %v978
        %v1011 = vadd.f32 %v831, %v981
        %v1012 = vadd.f32 %v836, %v986
        %v1013 = vadd.f32 %v839, %v989
        %v1014 = vadd.f32 %v844, %v994
        %v1015 = vadd.f32 %v847, %v997
        %v1016 = vld [vmem:[%s525 + $0x7] sm:$0xff]
        %v1017 = vld [vmem:[%s525 + $0xf] sm:$0xff]
        %v1018 = vld [vmem:[%s525 + $0x27] sm:$0xff]
        %v1019 = vld [vmem:[%s525 + $0x2f] sm:$0xff]
        %v1020 = vld [vmem:[%s525 + $0x47] sm:$0xff]
        %v1021 = vld [vmem:[%s525 + $0x4f] sm:$0xff]
        %v1022 = vld [vmem:[%s525 + $0x67] sm:$0xff]
        %v1023 = vld [vmem:[%s525 + $0x6f] sm:$0xff]
        %v1024 = vld [vmem:[%s525 + $0x87] sm:$0xff]
        %v1025 = vld [vmem:[%s525 + $0x8f] sm:$0xff]
        %v1026 = vld [vmem:[%s525 + $0xa7] sm:$0xff]
        %v1027 = vld [vmem:[%s525 + $0xaf] sm:$0xff]
        %v1028 = vld [vmem:[%s525 + $0xc7] sm:$0xff]
        %v1029 = vld [vmem:[%s525 + $0xcf] sm:$0xff]
        %v1030 = vld [vmem:[%s525 + $0xe7] sm:$0xff]
        %v1031 = vld [vmem:[%s525 + $0xef] sm:$0xff]
        %v1032 = vpack.c.bf16 %v1017, %v1016
        %v1033 = vpack.c.bf16 %v1019, %v1018
        %v1034 = vpack.c.bf16 %v1021, %v1020
        %v1035 = vpack.c.bf16 %v1023, %v1022
        %v1036 = vpack.c.bf16 %v1025, %v1024
        %v1037 = vpack.c.bf16 %v1027, %v1026
        %v1038 = vpack.c.bf16 %v1029, %v1028
        %v1039 = vpack.c.bf16 %v1031, %v1030
        %s1040 = scalar_lea.vmem %s5, 6
        %v1041 = vld [vmem:[%s1040] sm:$0x3]
        %v1043 = vsel %vm506, %v1032, 0
        %v1046 = vsel %vm506, %v1033, 0
        %v1049 = vsel %vm506, %v1034, 0
        %v1052 = vsel %vm506, %v1035, 0
        %v1055 = vsel %vm506, %v1036, 0
        %v1058 = vsel %vm506, %v1037, 0
        %v1061 = vsel %vm506, %v1038, 0
        %v1064 = vsel %vm506, %v1039, 0
        %v1067 = vsel %vm625, %v1041, 0
        %1069 = vmatprep.subr.bf16.mxu0 0
        %1070 = vmatpush1.bf16.msra.mxu0 %v1067
        %1071 = vmatprep.subr.bf16.mxu0 0
        %1072 = vmatpush1.bf16.msra.mxu0 0
        %1073 = vmatprep.subr.bf16.mxu0 0
        %1074 = vmatpush1.bf16.msra.mxu0 0
        %1075 = vmatprep.subr.bf16.mxu0 0
        %1076 = vmatpush1.bf16.msra.mxu0 0
        %1077 = vmatprep.subr.bf16.mxu0 0
        %1078 = vmatpush1.bf16.msra.mxu0 0
        %1079 = vmatprep.subr.bf16.mxu0 0
        %1080 = vmatpush1.bf16.msra.mxu0 0
        %1081 = vmatprep.subr.bf16.mxu0 0
        %1082 = vmatpush1.bf16.msra.mxu0 0
        %1083 = vmatprep.subr.bf16.mxu0 0
        %1084 = vmatpush1.bf16.msra.mxu0 0
        %1085 = vmatprep.subr.bf16.mxu0 0
        %1086 = vmatpush1.bf16.msra.mxu0 0
        %1087 = vmatprep.subr.bf16.mxu0 0
        %1088 = vmatpush1.bf16.msra.mxu0 0
        %1089 = vmatprep.subr.bf16.mxu0 0
        %1090 = vmatpush1.bf16.msra.mxu0 0
        %1091 = vmatprep.subr.bf16.mxu0 0
        %1092 = vmatpush1.bf16.msra.mxu0 0
        %1093 = vmatprep.subr.bf16.mxu0 0
        %1094 = vmatpush1.bf16.msra.mxu0 0
        %1095 = vmatprep.subr.bf16.mxu0 0
        %1096 = vmatpush1.bf16.msra.mxu0 0
        %1097 = vmatprep.subr.bf16.mxu0 0
        %1098 = vmatpush1.bf16.msra.mxu0 0
        %1099 = vmatprep.subr.bf16.mxu0 0
        %1100 = vmatpush1.bf16.msra.mxu0 0
        %1101 = vmatprep.mubr.bf16.mxu0 0
        %1102 = vmatmul.mubr.bf16.gmra.mrb[0].mxu0 %v1043
        %v1103 = vpop.f32.mrb[0].mxu0
        %v1104 = vadd.f32 0.0, %v1103
        %v1105 = vpop.f32.mrb[0].mxu0
        %v1106 = vpop.f32.mrb[0].mxu0
        %v1107 = vadd.f32 0.0, %v1106
        %v1108 = vpop.f32.mrb[0].mxu0
        %1109 = vmatprep.mubr.bf16.mxu0 0
        %1110 = vmatmul.mubr.bf16.gmra.mrb[0].mxu0 %v1046
        %v1111 = vpop.f32.mrb[0].mxu0
        %v1112 = vadd.f32 0.0, %v1111
        %v1113 = vpop.f32.mrb[0].mxu0
        %v1114 = vpop.f32.mrb[0].mxu0
        %v1115 = vadd.f32 0.0, %v1114
        %v1116 = vpop.f32.mrb[0].mxu0
        %1117 = vmatprep.mubr.bf16.mxu0 0
        %1118 = vmatmul.mubr.bf16.gmra.mrb[0].mxu0 %v1049
        %v1119 = vpop.f32.mrb[0].mxu0
        %v1120 = vadd.f32 0.0, %v1119
        %v1121 = vpop.f32.mrb[0].mxu0
        %v1122 = vpop.f32.mrb[0].mxu0
        %v1123 = vadd.f32 0.0, %v1122
        %v1124 = vpop.f32.mrb[0].mxu0
        %1125 = vmatprep.mubr.bf16.mxu0 0
        %1126 = vmatmul.mubr.bf16.gmra.mrb[0].mxu0 %v1052
        %v1127 = vpop.f32.mrb[0].mxu0
        %v1128 = vadd.f32 0.0, %v1127
        %v1129 = vpop.f32.mrb[0].mxu0
        %v1130 = vpop.f32.mrb[0].mxu0
        %v1131 = vadd.f32 0.0, %v1130
        %v1132 = vpop.f32.mrb[0].mxu0
        %1133 = vmatprep.mubr.bf16.mxu0 0
        %1134 = vmatmul.mubr.bf16.gmra.mrb[0].mxu0 %v1055
        %v1135 = vpop.f32.mrb[0].mxu0
        %v1136 = vadd.f32 0.0, %v1135
        %v1137 = vpop.f32.mrb[0].mxu0
        %v1138 = vpop.f32.mrb[0].mxu0
        %v1139 = vadd.f32 0.0, %v1138
        %v1140 = vpop.f32.mrb[0].mxu0
        %1141 = vmatprep.mubr.bf16.mxu0 0
        %1142 = vmatmul.mubr.bf16.gmra.mrb[0].mxu0 %v1058
        %v1143 = vpop.f32.mrb[0].mxu0
        %v1144 = vadd.f32 0.0, %v1143
        %v1145 = vpop.f32.mrb[0].mxu0
        %v1146 = vpop.f32.mrb[0].mxu0
        %v1147 = vadd.f32 0.0, %v1146
        %v1148 = vpop.f32.mrb[0].mxu0
        %1149 = vmatprep.mubr.bf16.mxu0 0
        %1150 = vmatmul.mubr.bf16.gmra.mrb[0].mxu0 %v1061
        %v1151 = vpop.f32.mrb[0].mxu0
        %v1152 = vadd.f32 0.0, %v1151
        %v1153 = vpop.f32.mrb[0].mxu0
        %v1154 = vpop.f32.mrb[0].mxu0
        %v1155 = vadd.f32 0.0, %v1154
        %v1156 = vpop.f32.mrb[0].mxu0
        %1157 = vmatprep.mubr.bf16.mxu0 0
        %1158 = vmatmul.mubr.bf16.gmra.mrb[0].mxu0 %v1064
        %v1159 = vpop.f32.mrb[0].mxu0
        %v1160 = vadd.f32 0.0, %v1159
        %v1161 = vpop.f32.mrb[0].mxu0
        %v1162 = vpop.f32.mrb[0].mxu0
        %v1163 = vadd.f32 0.0, %v1162
        %v1164 = vpop.f32.mrb[0].mxu0
        %1165 = vdwg.mxu0
        %v1166 = vadd.f32 %v1000, %v1104
        %v1167 = vadd.f32 %v1001, %v1107
        %v1168 = vadd.f32 %v1002, %v1112
        %v1169 = vadd.f32 %v1003, %v1115
        %v1170 = vadd.f32 %v1004, %v1120
        %v1171 = vadd.f32 %v1005, %v1123
        %v1172 = vadd.f32 %v1006, %v1128
        %v1173 = vadd.f32 %v1007, %v1131
        %v1174 = vadd.f32 %v1008, %v1136
        %v1175 = vadd.f32 %v1009, %v1139
        %v1176 = vadd.f32 %v1010, %v1144
        %v1177 = vadd.f32 %v1011, %v1147
        %v1178 = vadd.f32 %v1012, %v1152
        %v1179 = vadd.f32 %v1013, %v1155
        %v1180 = vadd.f32 %v1014, %v1160
        %v1181 = vadd.f32 %v1015, %v1163
        %v1182 = vld [vmem:[%s525 + $0x8] sm:$0xff]
        %v1183 = vld [vmem:[%s525 + $0x10] sm:$0xff]
        %v1184 = vld [vmem:[%s525 + $0x28] sm:$0xff]
        %v1185 = vld [vmem:[%s525 + $0x30] sm:$0xff]
        %v1186 = vld [vmem:[%s525 + $0x48] sm:$0xff]
        %v1187 = vld [vmem:[%s525 + $0x50] sm:$0xff]
        %v1188 = vld [vmem:[%s525 + $0x68] sm:$0xff]
        %v1189 = vld [vmem:[%s525 + $0x70] sm:$0xff]
        %v1190 = vld [vmem:[%s525 + $0x88] sm:$0xff]
        %v1191 = vld [vmem:[%s525 + $0x90] sm:$0xff]
        %v1192 = vld [vmem:[%s525 + $0xa8] sm:$0xff]
        %v1193 = vld [vmem:[%s525 + $0xb0] sm:$0xff]
        %v1194 = vld [vmem:[%s525 + $0xc8] sm:$0xff]
        %v1195 = vld [vmem:[%s525 + $0xd0] sm:$0xff]
        %v1196 = vld [vmem:[%s525 + $0xe8] sm:$0xff]
        %v1197 = vld [vmem:[%s525 + $0xf0] sm:$0xff]
        %v1198 = vpack.c.bf16 %v1183, %v1182
        %v1199 = vpack.c.bf16 %v1185, %v1184
        %v1200 = vpack.c.bf16 %v1187, %v1186
        %v1201 = vpack.c.bf16 %v1189, %v1188
        %v1202 = vpack.c.bf16 %v1191, %v1190
        %v1203 = vpack.c.bf16 %v1193, %v1192
        %v1204 = vpack.c.bf16 %v1195, %v1194
        %v1205 = vpack.c.bf16 %v1197, %v1196
        %s1206 = scalar_lea.vmem %s5, 8
        %v1207 = vld [vmem:[%s1206] sm:$0x3]
        %v1209 = vsel %vm506, %v1198, 0
        %v1212 = vsel %vm506, %v1199, 0
        %v1215 = vsel %vm506, %v1200, 0
        %v1218 = vsel %vm506, %v1201, 0
        %v1221 = vsel %vm506, %v1202, 0
        %v1224 = vsel %vm506, %v1203, 0
        %v1227 = vsel %vm506, %v1204, 0
        %v1230 = vsel %vm506, %v1205, 0
        %v1233 = vsel %vm625, %v1207, 0
        %1235 = vmatprep.subr.bf16.mxu0 0
        %1236 = vmatpush1.bf16.msra.mxu0 %v1233
        %1237 = vmatprep.subr.bf16.mxu0 0
        %1238 = vmatpush1.bf16.msra.mxu0 0
        %1239 = vmatprep.subr.bf16.mxu0 0
        %1240 = vmatpush1.bf16.msra.mxu0 0
        %1241 = vmatprep.subr.bf16.mxu0 0
        %1242 = vmatpush1.bf16.msra.mxu0 0
        %1243 = vmatprep.subr.bf16.mxu0 0
        %1244 = vmatpush1.bf16.msra.mxu0 0
        %1245 = vmatprep.subr.bf16.mxu0 0
        %1246 = vmatpush1.bf16.msra.mxu0 0
        %1247 = vmatprep.subr.bf16.mxu0 0
        %1248 = vmatpush1.bf16.msra.mxu0 0
        %1249 = vmatprep.subr.bf16.mxu0 0
        %1250 = vmatpush1.bf16.msra.mxu0 0
        %1251 = vmatprep.subr.bf16.mxu0 0
        %1252 = vmatpush1.bf16.msra.mxu0 0
        %1253 = vmatprep.subr.bf16.mxu0 0
        %1254 = vmatpush1.bf16.msra.mxu0 0
        %1255 = vmatprep.subr.bf16.mxu0 0
        %1256 = vmatpush1.bf16.msra.mxu0 0
        %1257 = vmatprep.subr.bf16.mxu0 0
        %1258 = vmatpush1.bf16.msra.mxu0 0
        %1259 = vmatprep.subr.bf16.mxu0 0
        %1260 = vmatpush1.bf16.msra.mxu0 0
        %1261 = vmatprep.subr.bf16.mxu0 0
        %1262 = vmatpush1.bf16.msra.mxu0 0
        %1263 = vmatprep.subr.bf16.mxu0 0
        %1264 = vmatpush1.bf16.msra.mxu0 0
        %1265 = vmatprep.subr.bf16.mxu0 0
        %1266 = vmatpush1.bf16.msra.mxu0 0
        %1267 = vmatprep.mubr.bf16.mxu0 0
        %1268 = vmatmul.mubr.bf16.gmra.mrb[0].mxu0 %v1209
        %v1269 = vpop.f32.mrb[0].mxu0
        %v1270 = vadd.f32 0.0, %v1269
        %v1271 = vpop.f32.mrb[0].mxu0
        %v1272 = vpop.f32.mrb[0].mxu0
        %v1273 = vadd.f32 0.0, %v1272
        %v1274 = vpop.f32.mrb[0].mxu0
        %1275 = vmatprep.mubr.bf16.mxu0 0
        %1276 = vmatmul.mubr.bf16.gmra.mrb[0].mxu0 %v1212
        %v1277 = vpop.f32.mrb[0].mxu0
        %v1278 = vadd.f32 0.0, %v1277
        %v1279 = vpop.f32.mrb[0].mxu0
        %v1280 = vpop.f32.mrb[0].mxu0
        %v1281 = vadd.f32 0.0, %v1280
        %v1282 = vpop.f32.mrb[0].mxu0
        %1283 = vmatprep.mubr.bf16.mxu0 0
        %1284 = vmatmul.mubr.bf16.gmra.mrb[0].mxu0 %v1215
        %v1285 = vpop.f32.mrb[0].mxu0
        %v1286 = vadd.f32 0.0, %v1285
        %v1287 = vpop.f32.mrb[0].mxu0
        %v1288 = vpop.f32.mrb[0].mxu0
        %v1289 = vadd.f32 0.0, %v1288
        %v1290 = vpop.f32.mrb[0].mxu0
        %1291 = vmatprep.mubr.bf16.mxu0 0
        %1292 = vmatmul.mubr.bf16.gmra.mrb[0].mxu0 %v1218
        %v1293 = vpop.f32.mrb[0].mxu0
        %v1294 = vadd.f32 0.0, %v1293
        %v1295 = vpop.f32.mrb[0].mxu0
        %v1296 = vpop.f32.mrb[0].mxu0
        %v1297 = vadd.f32 0.0, %v1296
        %v1298 = vpop.f32.mrb[0].mxu0
        %1299 = vmatprep.mubr.bf16.mxu0 0
        %1300 = vmatmul.mubr.bf16.gmra.mrb[0].mxu0 %v1221
        %v1301 = vpop.f32.mrb[0].mxu0
        %v1302 = vadd.f32 0.0, %v1301
        %v1303 = vpop.f32.mrb[0].mxu0
        %v1304 = vpop.f32.mrb[0].mxu0
        %v1305 = vadd.f32 0.0, %v1304
        %v1306 = vpop.f32.mrb[0].mxu0
        %1307 = vmatprep.mubr.bf16.mxu0 0
        %1308 = vmatmul.mubr.bf16.gmra.mrb[0].mxu0 %v1224
        %v1309 = vpop.f32.mrb[0].mxu0
        %v1310 = vadd.f32 0.0, %v1309
        %v1311 = vpop.f32.mrb[0].mxu0
        %v1312 = vpop.f32.mrb[0].mxu0
        %v1313 = vadd.f32 0.0, %v1312
        %v1314 = vpop.f32.mrb[0].mxu0
        %1315 = vmatprep.mubr.bf16.mxu0 0
        %1316 = vmatmul.mubr.bf16.gmra.mrb[0].mxu0 %v1227
        %v1317 = vpop.f32.mrb[0].mxu0
        %v1318 = vadd.f32 0.0, %v1317
        %v1319 = vpop.f32.mrb[0].mxu0
        %v1320 = vpop.f32.mrb[0].mxu0
        %v1321 = vadd.f32 0.0, %v1320
        %v1322 = vpop.f32.mrb[0].mxu0
        %1323 = vmatprep.mubr.bf16.mxu0 0
        %1324 = vmatmul.mubr.bf16.gmra.mrb[0].mxu0 %v1230
        %v1325 = vpop.f32.mrb[0].mxu0
        %v1326 = vadd.f32 0.0, %v1325
        %v1327 = vpop.f32.mrb[0].mxu0
        %v1328 = vpop.f32.mrb[0].mxu0
        %v1329 = vadd.f32 0.0, %v1328
        %v1330 = vpop.f32.mrb[0].mxu0
        %1331 = vdwg.mxu0
        %v1332 = vadd.f32 %v1166, %v1270
        %v1333 = vadd.f32 %v1167, %v1273
        %v1334 = vadd.f32 %v1168, %v1278
        %v1335 = vadd.f32 %v1169, %v1281
        %v1336 = vadd.f32 %v1170, %v1286
        %v1337 = vadd.f32 %v1171, %v1289
        %v1338 = vadd.f32 %v1172, %v1294
        %v1339 = vadd.f32 %v1173, %v1297
        %v1340 = vadd.f32 %v1174, %v1302
        %v1341 = vadd.f32 %v1175, %v1305
        %v1342 = vadd.f32 %v1176, %v1310
        %v1343 = vadd.f32 %v1177, %v1313
        %v1344 = vadd.f32 %v1178, %v1318
        %v1345 = vadd.f32 %v1179, %v1321
        %v1346 = vadd.f32 %v1180, %v1326
        %v1347 = vadd.f32 %v1181, %v1329
        %v1348 = vld [vmem:[%s525 + $0x9] sm:$0xff]
        %v1349 = vld [vmem:[%s525 + $0x11] sm:$0xff]
        %v1350 = vld [vmem:[%s525 + $0x29] sm:$0xff]
        %v1351 = vld [vmem:[%s525 + $0x31] sm:$0xff]
        %v1352 = vld [vmem:[%s525 + $0x49] sm:$0xff]
        %v1353 = vld [vmem:[%s525 + $0x51] sm:$0xff]
        %v1354 = vld [vmem:[%s525 + $0x69] sm:$0xff]
        %v1355 = vld [vmem:[%s525 + $0x71] sm:$0xff]
        %v1356 = vld [vmem:[%s525 + $0x89] sm:$0xff]
        %v1357 = vld [vmem:[%s525 + $0x91] sm:$0xff]
        %v1358 = vld [vmem:[%s525 + $0xa9] sm:$0xff]
        %v1359 = vld [vmem:[%s525 + $0xb1] sm:$0xff]
        %v1360 = vld [vmem:[%s525 + $0xc9] sm:$0xff]
        %v1361 = vld [vmem:[%s525 + $0xd1] sm:$0xff]
        %v1362 = vld [vmem:[%s525 + $0xe9] sm:$0xff]
        %v1363 = vld [vmem:[%s525 + $0xf1] sm:$0xff]
        %v1364 = vpack.c.bf16 %v1349, %v1348
        %v1365 = vpack.c.bf16 %v1351, %v1350
        %v1366 = vpack.c.bf16 %v1353, %v1352
        %v1367 = vpack.c.bf16 %v1355, %v1354
        %v1368 = vpack.c.bf16 %v1357, %v1356
        %v1369 = vpack.c.bf16 %v1359, %v1358
        %v1370 = vpack.c.bf16 %v1361, %v1360
        %v1371 = vpack.c.bf16 %v1363, %v1362
        %s1372 = scalar_lea.vmem %s5, 10
        %v1373 = vld [vmem:[%s1372] sm:$0x3]
        %v1375 = vsel %vm506, %v1364, 0
        %v1378 = vsel %vm506, %v1365, 0
        %v1381 = vsel %vm506, %v1366, 0
        %v1384 = vsel %vm506, %v1367, 0
        %v1387 = vsel %vm506, %v1368, 0
        %v1390 = vsel %vm506, %v1369, 0
        %v1393 = vsel %vm506, %v1370, 0
        %v1396 = vsel %vm506, %v1371, 0
        %v1399 = vsel %vm625, %v1373, 0
        %1401 = vmatprep.subr.bf16.mxu0 0
        %1402 = vmatpush1.bf16.msra.mxu0 %v1399
        %1403 = vmatprep.subr.bf16.mxu0 0
        %1404 = vmatpush1.bf16.msra.mxu0 0
        %1405 = vmatprep.subr.bf16.mxu0 0
        %1406 = vmatpush1.bf16.msra.mxu0 0
        %1407 = vmatprep.subr.bf16.mxu0 0
        %1408 = vmatpush1.bf16.msra.mxu0 0
        %1409 = vmatprep.subr.bf16.mxu0 0
        %1410 = vmatpush1.bf16.msra.mxu0 0
        %1411 = vmatprep.subr.bf16.mxu0 0
        %1412 = vmatpush1.bf16.msra.mxu0 0
        %1413 = vmatprep.subr.bf16.mxu0 0
        %1414 = vmatpush1.bf16.msra.mxu0 0
        %1415 = vmatprep.subr.bf16.mxu0 0
        %1416 = vmatpush1.bf16.msra.mxu0 0
        %1417 = vmatprep.subr.bf16.mxu0 0
        %1418 = vmatpush1.bf16.msra.mxu0 0
        %1419 = vmatprep.subr.bf16.mxu0 0
        %1420 = vmatpush1.bf16.msra.mxu0 0
        %1421 = vmatprep.subr.bf16.mxu0 0
        %1422 = vmatpush1.bf16.msra.mxu0 0
        %1423 = vmatprep.subr.bf16.mxu0 0
        %1424 = vmatpush1.bf16.msra.mxu0 0
        %1425 = vmatprep.subr.bf16.mxu0 0
        %1426 = vmatpush1.bf16.msra.mxu0 0
        %1427 = vmatprep.subr.bf16.mxu0 0
        %1428 = vmatpush1.bf16.msra.mxu0 0
        %1429 = vmatprep.subr.bf16.mxu0 0
        %1430 = vmatpush1.bf16.msra.mxu0 0
        %1431 = vmatprep.subr.bf16.mxu0 0
        %1432 = vmatpush1.bf16.msra.mxu0 0
        %1433 = vmatprep.mubr.bf16.mxu0 0
        %1434 = vmatmul.mubr.bf16.gmra.mrb[0].mxu0 %v1375
        %v1435 = vpop.f32.mrb[0].mxu0
        %v1436 = vadd.f32 0.0, %v1435
        %v1437 = vpop.f32.mrb[0].mxu0
        %v1438 = vpop.f32.mrb[0].mxu0
        %v1439 = vadd.f32 0.0, %v1438
        %v1440 = vpop.f32.mrb[0].mxu0
        %1441 = vmatprep.mubr.bf16.mxu0 0
        %1442 = vmatmul.mubr.bf16.gmra.mrb[0].mxu0 %v1378
        %v1443 = vpop.f32.mrb[0].mxu0
        %v1444 = vadd.f32 0.0, %v1443
        %v1445 = vpop.f32.mrb[0].mxu0
        %v1446 = vpop.f32.mrb[0].mxu0
        %v1447 = vadd.f32 0.0, %v1446
        %v1448 = vpop.f32.mrb[0].mxu0
        %1449 = vmatprep.mubr.bf16.mxu0 0
        %1450 = vmatmul.mubr.bf16.gmra.mrb[0].mxu0 %v1381
        %v1451 = vpop.f32.mrb[0].mxu0
        %v1452 = vadd.f32 0.0, %v1451
        %v1453 = vpop.f32.mrb[0].mxu0
        %v1454 = vpop.f32.mrb[0].mxu0
        %v1455 = vadd.f32 0.0, %v1454
        %v1456 = vpop.f32.mrb[0].mxu0
        %1457 = vmatprep.mubr.bf16.mxu0 0
        %1458 = vmatmul.mubr.bf16.gmra.mrb[0].mxu0 %v1384
        %v1459 = vpop.f32.mrb[0].mxu0
        %v1460 = vadd.f32 0.0, %v1459
        %v1461 = vpop.f32.mrb[0].mxu0
        %v1462 = vpop.f32.mrb[0].mxu0
        %v1463 = vadd.f32 0.0, %v1462
        %v1464 = vpop.f32.mrb[0].mxu0
        %1465 = vmatprep.mubr.bf16.mxu0 0
        %1466 = vmatmul.mubr.bf16.gmra.mrb[0].mxu0 %v1387
        %v1467 = vpop.f32.mrb[0].mxu0
        %v1468 = vadd.f32 0.0, %v1467
        %v1469 = vpop.f32.mrb[0].mxu0
        %v1470 = vpop.f32.mrb[0].mxu0
        %v1471 = vadd.f32 0.0, %v1470
        %v1472 = vpop.f32.mrb[0].mxu0
        %1473 = vmatprep.mubr.bf16.mxu0 0
        %1474 = vmatmul.mubr.bf16.gmra.mrb[0].mxu0 %v1390
        %v1475 = vpop.f32.mrb[0].mxu0
        %v1476 = vadd.f32 0.0, %v1475
        %v1477 = vpop.f32.mrb[0].mxu0
        %v1478 = vpop.f32.mrb[0].mxu0
        %v1479 = vadd.f32 0.0, %v1478
        %v1480 = vpop.f32.mrb[0].mxu0
        %1481 = vmatprep.mubr.bf16.mxu0 0
        %1482 = vmatmul.mubr.bf16.gmra.mrb[0].mxu0 %v1393
        %v1483 = vpop.f32.mrb[0].mxu0
        %v1484 = vadd.f32 0.0, %v1483
        %v1485 = vpop.f32.mrb[0].mxu0
        %v1486 = vpop.f32.mrb[0].mxu0
        %v1487 = vadd.f32 0.0, %v1486
        %v1488 = vpop.f32.mrb[0].mxu0
        %1489 = vmatprep.mubr.bf16.mxu0 0
        %1490 = vmatmul.mubr.bf16.gmra.mrb[0].mxu0 %v1396
        %v1491 = vpop.f32.mrb[0].mxu0
        %v1492 = vadd.f32 0.0, %v1491
        %v1493 = vpop.f32.mrb[0].mxu0
        %v1494 = vpop.f32.mrb[0].mxu0
        %v1495 = vadd.f32 0.0, %v1494
        %v1496 = vpop.f32.mrb[0].mxu0
        %1497 = vdwg.mxu0
        %v1498 = vadd.f32 %v1332, %v1436
        %v1499 = vadd.f32 %v1333, %v1439
        %v1500 = vadd.f32 %v1334, %v1444
        %v1501 = vadd.f32 %v1335, %v1447
        %v1502 = vadd.f32 %v1336, %v1452
        %v1503 = vadd.f32 %v1337, %v1455
        %v1504 = vadd.f32 %v1338, %v1460
        %v1505 = vadd.f32 %v1339, %v1463
        %v1506 = vadd.f32 %v1340, %v1468
        %v1507 = vadd.f32 %v1341, %v1471
        %v1508 = vadd.f32 %v1342, %v1476
        %v1509 = vadd.f32 %v1343, %v1479
        %v1510 = vadd.f32 %v1344, %v1484
        %v1511 = vadd.f32 %v1345, %v1487
        %v1512 = vadd.f32 %v1346, %v1492
        %v1513 = vadd.f32 %v1347, %v1495
        %s1514 = scalar_lea.vmem [#allocation2], 64
        %v1515 = vld [vmem:[%s1514 + $0x7] sm:$0xff]
        %v1516 = vld [vmem:[%s1514 + $0xf] sm:$0xff]
        %v1517 = vld [vmem:[%s1514 + $0x27] sm:$0xff]
        %v1518 = vld [vmem:[%s1514 + $0x2f] sm:$0xff]
        %v1519 = vld [vmem:[%s1514 + $0x47] sm:$0xff]
        %v1520 = vld [vmem:[%s1514 + $0x4f] sm:$0xff]
        %v1521 = vld [vmem:[%s1514 + $0x67] sm:$0xff]
        %v1522 = vld [vmem:[%s1514 + $0x6f] sm:$0xff]
        %v1523 = vld [vmem:[%s1514 + $0x87] sm:$0xff]
        %v1524 = vld [vmem:[%s1514 + $0x8f] sm:$0xff]
        %v1525 = vld [vmem:[%s1514 + $0xa7] sm:$0xff]
        %v1526 = vld [vmem:[%s1514 + $0xaf] sm:$0xff]
        %v1527 = vld [vmem:[%s1514 + $0xc7] sm:$0xff]
        %v1528 = vld [vmem:[%s1514 + $0xcf] sm:$0xff]
        %v1529 = vld [vmem:[%s1514 + $0xe7] sm:$0xff]
        %v1530 = vld [vmem:[%s1514 + $0xef] sm:$0xff]
        %v1531 = vpack.c.bf16 %v1516, %v1515
        %v1532 = vpack.c.bf16 %v1518, %v1517
        %v1533 = vpack.c.bf16 %v1520, %v1519
        %v1534 = vpack.c.bf16 %v1522, %v1521
        %v1535 = vpack.c.bf16 %v1524, %v1523
        %v1536 = vpack.c.bf16 %v1526, %v1525
        %v1537 = vpack.c.bf16 %v1528, %v1527
        %v1538 = vpack.c.bf16 %v1530, %v1529
        %s1539 = scalar_lea.vmem %s5, 12
        %v1540 = vld [vmem:[%s1539] sm:$0x3]
        %v1542 = vsel %vm506, %v1531, 0
        %v1545 = vsel %vm506, %v1532, 0
        %v1548 = vsel %vm506, %v1533, 0
        %v1551 = vsel %vm506, %v1534, 0
        %v1554 = vsel %vm506, %v1535, 0
        %v1557 = vsel %vm506, %v1536, 0
        %v1560 = vsel %vm506, %v1537, 0
        %v1563 = vsel %vm506, %v1538, 0
        %v1566 = vsel %vm625, %v1540, 0
        %1568 = vmatprep.subr.bf16.mxu0 0
        %1569 = vmatpush1.bf16.msra.mxu0 %v1566
        %1570 = vmatprep.subr.bf16.mxu0 0
        %1571 = vmatpush1.bf16.msra.mxu0 0
        %1572 = vmatprep.subr.bf16.mxu0 0
        %1573 = vmatpush1.bf16.msra.mxu0 0
        %1574 = vmatprep.subr.bf16.mxu0 0
        %1575 = vmatpush1.bf16.msra.mxu0 0
        %1576 = vmatprep.subr.bf16.mxu0 0
        %1577 = vmatpush1.bf16.msra.mxu0 0
        %1578 = vmatprep.subr.bf16.mxu0 0
        %1579 = vmatpush1.bf16.msra.mxu0 0
        %1580 = vmatprep.subr.bf16.mxu0 0
        %1581 = vmatpush1.bf16.msra.mxu0 0
        %1582 = vmatprep.subr.bf16.mxu0 0
        %1583 = vmatpush1.bf16.msra.mxu0 0
        %1584 = vmatprep.subr.bf16.mxu0 0
        %1585 = vmatpush1.bf16.msra.mxu0 0
        %1586 = vmatprep.subr.bf16.mxu0 0
        %1587 = vmatpush1.bf16.msra.mxu0 0
        %1588 = vmatprep.subr.bf16.mxu0 0
        %1589 = vmatpush1.bf16.msra.mxu0 0
        %1590 = vmatprep.subr.bf16.mxu0 0
        %1591 = vmatpush1.bf16.msra.mxu0 0
        %1592 = vmatprep.subr.bf16.mxu0 0
        %1593 = vmatpush1.bf16.msra.mxu0 0
        %1594 = vmatprep.subr.bf16.mxu0 0
        %1595 = vmatpush1.bf16.msra.mxu0 0
        %1596 = vmatprep.subr.bf16.mxu0 0
        %1597 = vmatpush1.bf16.msra.mxu0 0
        %1598 = vmatprep.subr.bf16.mxu0 0
        %1599 = vmatpush1.bf16.msra.mxu0 0
        %1600 = vmatprep.mubr.bf16.mxu0 0
        %1601 = vmatmul.mubr.bf16.gmra.mrb[0].mxu0 %v1542
        %v1602 = vpop.f32.mrb[0].mxu0
        %v1603 = vadd.f32 0.0, %v1602
        %v1604 = vpop.f32.mrb[0].mxu0
        %v1605 = vpop.f32.mrb[0].mxu0
        %v1606 = vadd.f32 0.0, %v1605
        %v1607 = vpop.f32.mrb[0].mxu0
        %1608 = vmatprep.mubr.bf16.mxu0 0
        %1609 = vmatmul.mubr.bf16.gmra.mrb[0].mxu0 %v1545
        %v1610 = vpop.f32.mrb[0].mxu0
        %v1611 = vadd.f32 0.0, %v1610
        %v1612 = vpop.f32.mrb[0].mxu0
        %v1613 = vpop.f32.mrb[0].mxu0
        %v1614 = vadd.f32 0.0, %v1613
        %v1615 = vpop.f32.mrb[0].mxu0
        %1616 = vmatprep.mubr.bf16.mxu0 0
        %1617 = vmatmul.mubr.bf16.gmra.mrb[0].mxu0 %v1548
        %v1618 = vpop.f32.mrb[0].mxu0
        %v1619 = vadd.f32 0.0, %v1618
        %v1620 = vpop.f32.mrb[0].mxu0
        %v1621 = vpop.f32.mrb[0].mxu0
        %v1622 = vadd.f32 0.0, %v1621
        %v1623 = vpop.f32.mrb[0].mxu0
        %1624 = vmatprep.mubr.bf16.mxu0 0
        %1625 = vmatmul.mubr.bf16.gmra.mrb[0].mxu0 %v1551
        %v1626 = vpop.f32.mrb[0].mxu0
        %v1627 = vadd.f32 0.0, %v1626
        %v1628 = vpop.f32.mrb[0].mxu0
        %v1629 = vpop.f32.mrb[0].mxu0
        %v1630 = vadd.f32 0.0, %v1629
        %v1631 = vpop.f32.mrb[0].mxu0
        %1632 = vmatprep.mubr.bf16.mxu0 0
        %1633 = vmatmul.mubr.bf16.gmra.mrb[0].mxu0 %v1554
        %v1634 = vpop.f32.mrb[0].mxu0
        %v1635 = vadd.f32 0.0, %v1634
        %v1636 = vpop.f32.mrb[0].mxu0
        %v1637 = vpop.f32.mrb[0].mxu0
        %v1638 = vadd.f32 0.0, %v1637
        %v1639 = vpop.f32.mrb[0].mxu0
        %1640 = vmatprep.mubr.bf16.mxu0 0
        %1641 = vmatmul.mubr.bf16.gmra.mrb[0].mxu0 %v1557
        %v1642 = vpop.f32.mrb[0].mxu0
        %v1643 = vadd.f32 0.0, %v1642
        %v1644 = vpop.f32.mrb[0].mxu0
        %v1645 = vpop.f32.mrb[0].mxu0
        %v1646 = vadd.f32 0.0, %v1645
        %v1647 = vpop.f32.mrb[0].mxu0
        %1648 = vmatprep.mubr.bf16.mxu0 0
        %1649 = vmatmul.mubr.bf16.gmra.mrb[0].mxu0 %v1560
        %v1650 = vpop.f32.mrb[0].mxu0
        %v1651 = vadd.f32 0.0, %v1650
        %v1652 = vpop.f32.mrb[0].mxu0
        %v1653 = vpop.f32.mrb[0].mxu0
        %v1654 = vadd.f32 0.0, %v1653
        %v1655 = vpop.f32.mrb[0].mxu0
        %1656 = vmatprep.mubr.bf16.mxu0 0
        %1657 = vmatmul.mubr.bf16.gmra.mrb[0].mxu0 %v1563
        %v1658 = vpop.f32.mrb[0].mxu0
        %v1659 = vadd.f32 0.0, %v1658
        %v1660 = vpop.f32.mrb[0].mxu0
        %v1661 = vpop.f32.mrb[0].mxu0
        %v1662 = vadd.f32 0.0, %v1661
        %v1663 = vpop.f32.mrb[0].mxu0
        %1664 = vdwg.mxu0
        %v1665 = vadd.f32 %v1498, %v1603
        %v1666 = vadd.f32 %v1499, %v1606
        %v1667 = vadd.f32 %v1500, %v1611
        %v1668 = vadd.f32 %v1501, %v1614
        %v1669 = vadd.f32 %v1502, %v1619
        %v1670 = vadd.f32 %v1503, %v1622
        %v1671 = vadd.f32 %v1504, %v1627
        %v1672 = vadd.f32 %v1505, %v1630
        %v1673 = vadd.f32 %v1506, %v1635
        %v1674 = vadd.f32 %v1507, %v1638
        %v1675 = vadd.f32 %v1508, %v1643
        %v1676 = vadd.f32 %v1509, %v1646
        %v1677 = vadd.f32 %v1510, %v1651
        %v1678 = vadd.f32 %v1511, %v1654
        %v1679 = vadd.f32 %v1512, %v1659
        %v1680 = vadd.f32 %v1513, %v1662
        %v1681 = vld [vmem:[%s1514 + $0x8] sm:$0xff]
        %v1682 = vld [vmem:[%s1514 + $0x10] sm:$0xff]
        %v1683 = vld [vmem:[%s1514 + $0x28] sm:$0xff]
        %v1684 = vld [vmem:[%s1514 + $0x30] sm:$0xff]
        %v1685 = vld [vmem:[%s1514 + $0x48] sm:$0xff]
        %v1686 = vld [vmem:[%s1514 + $0x50] sm:$0xff]
        %v1687 = vld [vmem:[%s1514 + $0x68] sm:$0xff]
        %v1688 = vld [vmem:[%s1514 + $0x70] sm:$0xff]
        %v1689 = vld [vmem:[%s1514 + $0x88] sm:$0xff]
        %v1690 = vld [vmem:[%s1514 + $0x90] sm:$0xff]
        %v1691 = vld [vmem:[%s1514 + $0xa8] sm:$0xff]
        %v1692 = vld [vmem:[%s1514 + $0xb0] sm:$0xff]
        %v1693 = vld [vmem:[%s1514 + $0xc8] sm:$0xff]
        %v1694 = vld [vmem:[%s1514 + $0xd0] sm:$0xff]
        %v1695 = vld [vmem:[%s1514 + $0xe8] sm:$0xff]
        %v1696 = vld [vmem:[%s1514 + $0xf0] sm:$0xff]
        %v1697 = vpack.c.bf16 %v1682, %v1681
        %v1698 = vpack.c.bf16 %v1684, %v1683
        %v1699 = vpack.c.bf16 %v1686, %v1685
        %v1700 = vpack.c.bf16 %v1688, %v1687
        %v1701 = vpack.c.bf16 %v1690, %v1689
        %v1702 = vpack.c.bf16 %v1692, %v1691
        %v1703 = vpack.c.bf16 %v1694, %v1693
        %v1704 = vpack.c.bf16 %v1696, %v1695
        %s1705 = scalar_lea.vmem %s5, 14
        %v1706 = vld [vmem:[%s1705] sm:$0x3]
        %v1708 = vsel %vm506, %v1697, 0
        %v1711 = vsel %vm506, %v1698, 0
        %v1714 = vsel %vm506, %v1699, 0
        %v1717 = vsel %vm506, %v1700, 0
        %v1720 = vsel %vm506, %v1701, 0
        %v1723 = vsel %vm506, %v1702, 0
        %v1726 = vsel %vm506, %v1703, 0
        %v1729 = vsel %vm506, %v1704, 0
        %v1732 = vsel %vm625, %v1706, 0
        %1734 = vmatprep.subr.bf16.mxu0 0
        %1735 = vmatpush1.bf16.msra.mxu0 %v1732
        %1736 = vmatprep.subr.bf16.mxu0 0
        %1737 = vmatpush1.bf16.msra.mxu0 0
        %1738 = vmatprep.subr.bf16.mxu0 0
        %1739 = vmatpush1.bf16.msra.mxu0 0
        %1740 = vmatprep.subr.bf16.mxu0 0
        %1741 = vmatpush1.bf16.msra.mxu0 0
        %1742 = vmatprep.subr.bf16.mxu0 0
        %1743 = vmatpush1.bf16.msra.mxu0 0
        %1744 = vmatprep.subr.bf16.mxu0 0
        %1745 = vmatpush1.bf16.msra.mxu0 0
        %1746 = vmatprep.subr.bf16.mxu0 0
        %1747 = vmatpush1.bf16.msra.mxu0 0
        %1748 = vmatprep.subr.bf16.mxu0 0
        %1749 = vmatpush1.bf16.msra.mxu0 0
        %1750 = vmatprep.subr.bf16.mxu0 0
        %1751 = vmatpush1.bf16.msra.mxu0 0
        %1752 = vmatprep.subr.bf16.mxu0 0
        %1753 = vmatpush1.bf16.msra.mxu0 0
        %1754 = vmatprep.subr.bf16.mxu0 0
        %1755 = vmatpush1.bf16.msra.mxu0 0
        %1756 = vmatprep.subr.bf16.mxu0 0
        %1757 = vmatpush1.bf16.msra.mxu0 0
        %1758 = vmatprep.subr.bf16.mxu0 0
        %1759 = vmatpush1.bf16.msra.mxu0 0
        %1760 = vmatprep.subr.bf16.mxu0 0
        %1761 = vmatpush1.bf16.msra.mxu0 0
        %1762 = vmatprep.subr.bf16.mxu0 0
        %1763 = vmatpush1.bf16.msra.mxu0 0
        %1764 = vmatprep.subr.bf16.mxu0 0
        %1765 = vmatpush1.bf16.msra.mxu0 0
        %1766 = vmatprep.mubr.bf16.mxu0 0
        %1767 = vmatmul.mubr.bf16.gmra.mrb[0].mxu0 %v1708
        %v1768 = vpop.f32.mrb[0].mxu0
        %v1769 = vadd.f32 0.0, %v1768
        %v1770 = vpop.f32.mrb[0].mxu0
        %v1771 = vpop.f32.mrb[0].mxu0
        %v1772 = vadd.f32 0.0, %v1771
        %v1773 = vpop.f32.mrb[0].mxu0
        %1774 = vmatprep.mubr.bf16.mxu0 0
        %1775 = vmatmul.mubr.bf16.gmra.mrb[0].mxu0 %v1711
        %v1776 = vpop.f32.mrb[0].mxu0
        %v1777 = vadd.f32 0.0, %v1776
        %v1778 = vpop.f32.mrb[0].mxu0
        %v1779 = vpop.f32.mrb[0].mxu0
        %v1780 = vadd.f32 0.0, %v1779
        %v1781 = vpop.f32.mrb[0].mxu0
        %1782 = vmatprep.mubr.bf16.mxu0 0
        %1783 = vmatmul.mubr.bf16.gmra.mrb[0].mxu0 %v1714
        %v1784 = vpop.f32.mrb[0].mxu0
        %v1785 = vadd.f32 0.0, %v1784
        %v1786 = vpop.f32.mrb[0].mxu0
        %v1787 = vpop.f32.mrb[0].mxu0
        %v1788 = vadd.f32 0.0, %v1787
        %v1789 = vpop.f32.mrb[0].mxu0
        %1790 = vmatprep.mubr.bf16.mxu0 0
        %1791 = vmatmul.mubr.bf16.gmra.mrb[0].mxu0 %v1717
        %v1792 = vpop.f32.mrb[0].mxu0
        %v1793 = vadd.f32 0.0, %v1792
        %v1794 = vpop.f32.mrb[0].mxu0
        %v1795 = vpop.f32.mrb[0].mxu0
        %v1796 = vadd.f32 0.0, %v1795
        %v1797 = vpop.f32.mrb[0].mxu0
        %1798 = vmatprep.mubr.bf16.mxu0 0
        %1799 = vmatmul.mubr.bf16.gmra.mrb[0].mxu0 %v1720
        %v1800 = vpop.f32.mrb[0].mxu0
        %v1801 = vadd.f32 0.0, %v1800
        %v1802 = vpop.f32.mrb[0].mxu0
        %v1803 = vpop.f32.mrb[0].mxu0
        %v1804 = vadd.f32 0.0, %v1803
        %v1805 = vpop.f32.mrb[0].mxu0
        %1806 = vmatprep.mubr.bf16.mxu0 0
        %1807 = vmatmul.mubr.bf16.gmra.mrb[0].mxu0 %v1723
        %v1808 = vpop.f32.mrb[0].mxu0
        %v1809 = vadd.f32 0.0, %v1808
        %v1810 = vpop.f32.mrb[0].mxu0
        %v1811 = vpop.f32.mrb[0].mxu0
        %v1812 = vadd.f32 0.0, %v1811
        %v1813 = vpop.f32.mrb[0].mxu0
        %1814 = vmatprep.mubr.bf16.mxu0 0
        %1815 = vmatmul.mubr.bf16.gmra.mrb[0].mxu0 %v1726
        %v1816 = vpop.f32.mrb[0].mxu0
        %v1817 = vadd.f32 0.0, %v1816
        %v1818 = vpop.f32.mrb[0].mxu0
        %v1819 = vpop.f32.mrb[0].mxu0
        %v1820 = vadd.f32 0.0, %v1819
        %v1821 = vpop.f32.mrb[0].mxu0
        %1822 = vmatprep.mubr.bf16.mxu0 0
        %1823 = vmatmul.mubr.bf16.gmra.mrb[0].mxu0 %v1729
        %v1824 = vpop.f32.mrb[0].mxu0
        %v1825 = vadd.f32 0.0, %v1824
        %v1826 = vpop.f32.mrb[0].mxu0
        %v1827 = vpop.f32.mrb[0].mxu0
        %v1828 = vadd.f32 0.0, %v1827
        %v1829 = vpop.f32.mrb[0].mxu0
        %1830 = vdwg.mxu0
        %v1831 = vadd.f32 %v1665, %v1769
        %v1832 = vadd.f32 %v1666, %v1772
        %v1833 = vadd.f32 %v1667, %v1777
        %v1834 = vadd.f32 %v1668, %v1780
        %v1835 = vadd.f32 %v1669, %v1785
        %v1836 = vadd.f32 %v1670, %v1788
        %v1837 = vadd.f32 %v1671, %v1793
        %v1838 = vadd.f32 %v1672, %v1796
        %v1839 = vadd.f32 %v1673, %v1801
        %v1840 = vadd.f32 %v1674, %v1804
        %v1841 = vadd.f32 %v1675, %v1809
        %v1842 = vadd.f32 %v1676, %v1812
        %v1843 = vadd.f32 %v1677, %v1817
        %v1844 = vadd.f32 %v1678, %v1820
        %v1845 = vadd.f32 %v1679, %v1825
        %v1846 = vadd.f32 %v1680, %v1828
        %v1847 = vld [vmem:[%s1514 + $0x9] sm:$0xff]
        %v1848 = vld [vmem:[%s1514 + $0x11] sm:$0xff]
        %v1849 = vld [vmem:[%s1514 + $0x29] sm:$0xff]
        %v1850 = vld [vmem:[%s1514 + $0x31] sm:$0xff]
        %v1851 = vld [vmem:[%s1514 + $0x49] sm:$0xff]
        %v1852 = vld [vmem:[%s1514 + $0x51] sm:$0xff]
        %v1853 = vld [vmem:[%s1514 + $0x69] sm:$0xff]
        %v1854 = vld [vmem:[%s1514 + $0x71] sm:$0xff]
        %v1855 = vld [vmem:[%s1514 + $0x89] sm:$0xff]
        %v1856 = vld [vmem:[%s1514 + $0x91] sm:$0xff]
        %v1857 = vld [vmem:[%s1514 + $0xa9] sm:$0xff]
        %v1858 = vld [vmem:[%s1514 + $0xb1] sm:$0xff]
        %v1859 = vld [vmem:[%s1514 + $0xc9] sm:$0xff]
        %v1860 = vld [vmem:[%s1514 + $0xd1] sm:$0xff]
        %v1861 = vld [vmem:[%s1514 + $0xe9] sm:$0xff]
        %v1862 = vld [vmem:[%s1514 + $0xf1] sm:$0xff]
        %v1863 = vpack.c.bf16 %v1848, %v1847
        %v1864 = vpack.c.bf16 %v1850, %v1849
        %v1865 = vpack.c.bf16 %v1852, %v1851
        %v1866 = vpack.c.bf16 %v1854, %v1853
        %v1867 = vpack.c.bf16 %v1856, %v1855
        %v1868 = vpack.c.bf16 %v1858, %v1857
        %v1869 = vpack.c.bf16 %v1860, %v1859
        %v1870 = vpack.c.bf16 %v1862, %v1861
        %s1871 = scalar_lea.vmem %s5, 16
        %v1872 = vld [vmem:[%s1871] sm:$0x3]
        %v1874 = vsel %vm506, %v1863, 0
        %v1877 = vsel %vm506, %v1864, 0
        %v1880 = vsel %vm506, %v1865, 0
        %v1883 = vsel %vm506, %v1866, 0
        %v1886 = vsel %vm506, %v1867, 0
        %v1889 = vsel %vm506, %v1868, 0
        %v1892 = vsel %vm506, %v1869, 0
        %v1895 = vsel %vm506, %v1870, 0
        %v1898 = vsel %vm625, %v1872, 0
        %1900 = vmatprep.subr.bf16.mxu0 0
        %1901 = vmatpush1.bf16.msra.mxu0 %v1898
        %1902 = vmatprep.subr.bf16.mxu0 0
        %1903 = vmatpush1.bf16.msra.mxu0 0
        %1904 = vmatprep.subr.bf16.mxu0 0
        %1905 = vmatpush1.bf16.msra.mxu0 0
        %1906 = vmatprep.subr.bf16.mxu0 0
        %1907 = vmatpush1.bf16.msra.mxu0 0
        %1908 = vmatprep.subr.bf16.mxu0 0
        %1909 = vmatpush1.bf16.msra.mxu0 0
        %1910 = vmatprep.subr.bf16.mxu0 0
        %1911 = vmatpush1.bf16.msra.mxu0 0
        %1912 = vmatprep.subr.bf16.mxu0 0
        %1913 = vmatpush1.bf16.msra.mxu0 0
        %1914 = vmatprep.subr.bf16.mxu0 0
        %1915 = vmatpush1.bf16.msra.mxu0 0
        %1916 = vmatprep.subr.bf16.mxu0 0
        %1917 = vmatpush1.bf16.msra.mxu0 0
        %1918 = vmatprep.subr.bf16.mxu0 0
        %1919 = vmatpush1.bf16.msra.mxu0 0
        %1920 = vmatprep.subr.bf16.mxu0 0
        %1921 = vmatpush1.bf16.msra.mxu0 0
        %1922 = vmatprep.subr.bf16.mxu0 0
        %1923 = vmatpush1.bf16.msra.mxu0 0
        %1924 = vmatprep.subr.bf16.mxu0 0
        %1925 = vmatpush1.bf16.msra.mxu0 0
        %1926 = vmatprep.subr.bf16.mxu0 0
        %1927 = vmatpush1.bf16.msra.mxu0 0
        %1928 = vmatprep.subr.bf16.mxu0 0
        %1929 = vmatpush1.bf16.msra.mxu0 0
        %1930 = vmatprep.subr.bf16.mxu0 0
        %1931 = vmatpush1.bf16.msra.mxu0 0
        %1932 = vmatprep.mubr.bf16.mxu0 0
        %1933 = vmatmul.mubr.bf16.gmra.mrb[0].mxu0 %v1874
        %v1934 = vpop.f32.mrb[0].mxu0
        %v1935 = vadd.f32 0.0, %v1934
        %v1936 = vpop.f32.mrb[0].mxu0
        %v1937 = vpop.f32.mrb[0].mxu0
        %v1938 = vadd.f32 0.0, %v1937
        %v1939 = vpop.f32.mrb[0].mxu0
        %1940 = vmatprep.mubr.bf16.mxu0 0
        %1941 = vmatmul.mubr.bf16.gmra.mrb[0].mxu0 %v1877
        %v1942 = vpop.f32.mrb[0].mxu0
        %v1943 = vadd.f32 0.0, %v1942
        %v1944 = vpop.f32.mrb[0].mxu0
        %v1945 = vpop.f32.mrb[0].mxu0
        %v1946 = vadd.f32 0.0, %v1945
        %v1947 = vpop.f32.mrb[0].mxu0
        %1948 = vmatprep.mubr.bf16.mxu0 0
        %1949 = vmatmul.mubr.bf16.gmra.mrb[0].mxu0 %v1880
        %v1950 = vpop.f32.mrb[0].mxu0
        %v1951 = vadd.f32 0.0, %v1950
        %v1952 = vpop.f32.mrb[0].mxu0
        %v1953 = vpop.f32.mrb[0].mxu0
        %v1954 = vadd.f32 0.0, %v1953
        %v1955 = vpop.f32.mrb[0].mxu0
        %1956 = vmatprep.mubr.bf16.mxu0 0
        %1957 = vmatmul.mubr.bf16.gmra.mrb[0].mxu0 %v1883
        %v1958 = vpop.f32.mrb[0].mxu0
        %v1959 = vadd.f32 0.0, %v1958
        %v1960 = vpop.f32.mrb[0].mxu0
        %v1961 = vpop.f32.mrb[0].mxu0
        %v1962 = vadd.f32 0.0, %v1961
        %v1963 = vpop.f32.mrb[0].mxu0
        %1964 = vmatprep.mubr.bf16.mxu0 0
        %1965 = vmatmul.mubr.bf16.gmra.mrb[0].mxu0 %v1886
        %v1966 = vpop.f32.mrb[0].mxu0
        %v1967 = vadd.f32 0.0, %v1966
        %v1968 = vpop.f32.mrb[0].mxu0
        %v1969 = vpop.f32.mrb[0].mxu0
        %v1970 = vadd.f32 0.0, %v1969
        %v1971 = vpop.f32.mrb[0].mxu0
        %1972 = vmatprep.mubr.bf16.mxu0 0
        %1973 = vmatmul.mubr.bf16.gmra.mrb[0].mxu0 %v1889
        %v1974 = vpop.f32.mrb[0].mxu0
        %v1975 = vadd.f32 0.0, %v1974
        %v1976 = vpop.f32.mrb[0].mxu0
        %v1977 = vpop.f32.mrb[0].mxu0
        %v1978 = vadd.f32 0.0, %v1977
        %v1979 = vpop.f32.mrb[0].mxu0
        %1980 = vmatprep.mubr.bf16.mxu0 0
        %1981 = vmatmul.mubr.bf16.gmra.mrb[0].mxu0 %v1892
        %v1982 = vpop.f32.mrb[0].mxu0
        %v1983 = vadd.f32 0.0, %v1982
        %v1984 = vpop.f32.mrb[0].mxu0
        %v1985 = vpop.f32.mrb[0].mxu0
        %v1986 = vadd.f32 0.0, %v1985
        %v1987 = vpop.f32.mrb[0].mxu0
        %1988 = vmatprep.mubr.bf16.mxu0 0
        %1989 = vmatmul.mubr.bf16.gmra.mrb[0].mxu0 %v1895
        %v1990 = vpop.f32.mrb[0].mxu0
        %v1991 = vadd.f32 0.0, %v1990
        %v1992 = vpop.f32.mrb[0].mxu0
        %v1993 = vpop.f32.mrb[0].mxu0
        %v1994 = vadd.f32 0.0, %v1993
        %v1995 = vpop.f32.mrb[0].mxu0
        %1996 = vdwg.mxu0
        %v1997 = vadd.f32 %v1831, %v1935
        %v1998 = vadd.f32 %v1832, %v1938
        %v1999 = vadd.f32 %v1833, %v1943
        %v2000 = vadd.f32 %v1834, %v1946
        %v2001 = vadd.f32 %v1835, %v1951
        %v2002 = vadd.f32 %v1836, %v1954
        %v2003 = vadd.f32 %v1837, %v1959
        %v2004 = vadd.f32 %v1838, %v1962
        %v2005 = vadd.f32 %v1839, %v1967
        %v2006 = vadd.f32 %v1840, %v1970
        %v2007 = vadd.f32 %v1841, %v1975
        %v2008 = vadd.f32 %v1842, %v1978
        %v2009 = vadd.f32 %v1843, %v1983
        %v2010 = vadd.f32 %v1844, %v1986
        %v2011 = vadd.f32 %v1845, %v1991
        %v2012 = vadd.f32 %v1846, %v1994
        %v2013 = vld [vmem:[%s6] sm:$0x1]
        %v2015 = vlaneseq
        %v2016 = vshrl.u32 %v2015, 7
        %v2017 = vsub.s32 0, %v2016
        %v2018 = vrot.slane %v2013, %v2017
        %v2020 = vadd.f32 %v1997, %v2018
        %v2021 = vadd.f32 %v1998, %v2018
        %v2022 = vadd.f32 %v1999, %v2018
        %v2023 = vadd.f32 %v2000, %v2018
        %v2024 = vadd.f32 %v2001, %v2018
        %v2025 = vadd.f32 %v2002, %v2018
        %v2026 = vadd.f32 %v2003, %v2018
        %v2027 = vadd.f32 %v2004, %v2018
        %v2028 = vadd.f32 %v2005, %v2018
        %v2029 = vadd.f32 %v2006, %v2018
        %v2030 = vadd.f32 %v2007, %v2018
        %v2031 = vadd.f32 %v2008, %v2018
        %v2032 = vadd.f32 %v2009, %v2018
        %v2033 = vadd.f32 %v2010, %v2018
        %v2034 = vadd.f32 %v2011, %v2018
        %v2035 = vadd.f32 %v2012, %v2018
        %v2036 = vpack.c.bf16 %v2021, %v2020
        %v2037 = vpack.c.bf16 %v2023, %v2022
        %v2038 = vpack.c.bf16 %v2025, %v2024
        %v2039 = vpack.c.bf16 %v2027, %v2026
        %v2040 = vpack.c.bf16 %v2029, %v2028
        %v2041 = vpack.c.bf16 %v2031, %v2030
        %v2042 = vpack.c.bf16 %v2033, %v2032
        %v2043 = vpack.c.bf16 %v2035, %v2034
        %v2052 = vunpack.c.l.b16 %v2036
        %v2053 = vunpack.c.h.b16 %v2036
        %v2054 = vunpack.c.l.b16 %v2037
        %v2055 = vunpack.c.h.b16 %v2037
        %v2056 = vunpack.c.l.b16 %v2038
        %v2057 = vunpack.c.h.b16 %v2038
        %v2058 = vunpack.c.l.b16 %v2039
        %v2059 = vunpack.c.h.b16 %v2039
        %v2060 = vunpack.c.l.b16 %v2040
        %v2061 = vunpack.c.h.b16 %v2040
        %v2062 = vunpack.c.l.b16 %v2041
        %v2063 = vunpack.c.h.b16 %v2041
        %v2064 = vunpack.c.l.b16 %v2042
        %v2065 = vunpack.c.h.b16 %v2042
        %v2066 = vunpack.c.l.b16 %v2043
        %v2067 = vunpack.c.h.b16 %v2043
        %v2068 = vpack.c.b16 %v2052, %v2052
        %v2069 = vpack.c.b16 %v2053, %v2053
        %v2070 = vpack.c.b16 %v2054, %v2054
        %v2071 = vpack.c.b16 %v2055, %v2055
        %v2072 = vpack.c.b16 %v2056, %v2056
        %v2073 = vpack.c.b16 %v2057, %v2057
        %v2074 = vpack.c.b16 %v2058, %v2058
        %v2075 = vpack.c.b16 %v2059, %v2059
        %v2076 = vpack.c.b16 %v2060, %v2060
        %v2077 = vpack.c.b16 %v2061, %v2061
        %v2078 = vpack.c.b16 %v2062, %v2062
        %v2079 = vpack.c.b16 %v2063, %v2063
        %v2080 = vpack.c.b16 %v2064, %v2064
        %v2081 = vpack.c.b16 %v2065, %v2065
        %v2082 = vpack.c.b16 %v2066, %v2066
        %v2083 = vpack.c.b16 %v2067, %v2067
        %2100 = vst [vmem:[%s421] sm:$0xf] %v2068
        %2101 = vst [vmem:[%s421 + $0x4] sm:$0xf] %v2069
        %2102 = vst [vmem:[%s421 + $0x8] sm:$0xf] %v2070
        %2103 = vst [vmem:[%s421 + $0xc] sm:$0xf] %v2071
        %2104 = vst [vmem:[%s421 + $0x10] sm:$0xf] %v2072
        %2105 = vst [vmem:[%s421 + $0x14] sm:$0xf] %v2073
        %2106 = vst [vmem:[%s421 + $0x18] sm:$0xf] %v2074
        %2107 = vst [vmem:[%s421 + $0x1c] sm:$0xf] %v2075
        %2108 = vst [vmem:[%s421 + $0x20] sm:$0xf] %v2076
        %2109 = vst [vmem:[%s421 + $0x24] sm:$0xf] %v2077
        %2110 = vst [vmem:[%s421 + $0x28] sm:$0xf] %v2078
        %2111 = vst [vmem:[%s421 + $0x2c] sm:$0xf] %v2079
        %2112 = vst [vmem:[%s421 + $0x30] sm:$0xf] %v2080
        %2113 = vst [vmem:[%s421 + $0x34] sm:$0xf] %v2081
        %2114 = vst [vmem:[%s421 + $0x38] sm:$0xf] %v2082
        %2115 = vst [vmem:[%s421 + $0x3c] sm:$0xf] %v2083
        %v2116 = vadd.f32 %v2020, %v2021
        %v2117 = vadd.f32 %v2116, %v2022
        %v2118 = vadd.f32 %v2117, %v2023
        %v2119 = vadd.f32 %v2118, %v2024
        %v2120 = vadd.f32 %v2119, %v2025
        %v2121 = vadd.f32 %v2120, %v2026
        %v2122 = vadd.f32 %v2121, %v2027
        %v2123 = vadd.f32 %v2122, %v2028
        %v2124 = vadd.f32 %v2123, %v2029
        %v2125 = vadd.f32 %v2124, %v2030
        %v2126 = vadd.f32 %v2125, %v2031
        %v2127 = vadd.f32 %v2126, %v2032
        %v2128 = vadd.f32 %v2127, %v2033
        %v2129 = vadd.f32 %v2128, %v2034
        %v2130 = vadd.f32 %v2129, %v2035
        %v2131 = vrot.slane %v2130, 4
        %v2132 = vadd.f32 %v2130, %v2131
        %v2133 = vrot.slane %v2132, 2
        %v2134 = vadd.f32 %v2132, %v2133
        %v2135 = vrot.slane %v2134, 1
        %v2136 = vadd.f32 %v2134, %v2135
        %v2137 = vmul.f32 %v2020, %v2020
        %v2138 = vmul.f32 %v2021, %v2021
        %v2139 = vmul.f32 %v2022, %v2022
        %v2140 = vmul.f32 %v2023, %v2023
        %v2141 = vmul.f32 %v2024, %v2024
        %v2142 = vmul.f32 %v2025, %v2025
        %v2143 = vmul.f32 %v2026, %v2026
        %v2144 = vmul.f32 %v2027, %v2027
        %v2145 = vmul.f32 %v2028, %v2028
        %v2146 = vmul.f32 %v2029, %v2029
        %v2147 = vmul.f32 %v2030, %v2030
        %v2148 = vmul.f32 %v2031, %v2031
        %v2149 = vmul.f32 %v2032, %v2032
        %v2150 = vmul.f32 %v2033, %v2033
        %v2151 = vmul.f32 %v2034, %v2034
        %v2152 = vmul.f32 %v2035, %v2035
        %v2153 = vadd.f32 %v2137, %v2138
        %v2154 = vadd.f32 %v2153, %v2139
        %v2155 = vadd.f32 %v2154, %v2140
        %v2156 = vadd.f32 %v2155, %v2141
        %v2157 = vadd.f32 %v2156, %v2142
        %v2158 = vadd.f32 %v2157, %v2143
        %v2159 = vadd.f32 %v2158, %v2144
        %v2160 = vadd.f32 %v2159, %v2145
        %v2161 = vadd.f32 %v2160, %v2146
        %v2162 = vadd.f32 %v2161, %v2147
        %v2163 = vadd.f32 %v2162, %v2148
        %v2164 = vadd.f32 %v2163, %v2149
        %v2165 = vadd.f32 %v2164, %v2150
        %v2166 = vadd.f32 %v2165, %v2151
        %v2167 = vadd.f32 %v2166, %v2152
        %v2168 = vrot.slane %v2167, 4
        %v2169 = vadd.f32 %v2167, %v2168
        %v2170 = vrot.slane %v2169, 2
        %v2171 = vadd.f32 %v2169, %v2170
        %v2172 = vrot.slane %v2171, 1
        %v2173 = vadd.f32 %v2171, %v2172
        %vm2174 = vcmask 1040384
        %v2175 = vsel %vm2174, %v2136, %v2173
        %2176 = vst [vmem:[%s428] sm:$0x3] %v2175
        %s2177 = sand.u32 %s232, 1
        %s2178 = scalar_lea.sflag [#allocation4], %s2177
        %s2179 = sand.u32 %s232, 1
        %s2180 = smul.addr %s2179, 64
        %s2181 = scalar_lea.vmem [#allocation3], %s2180
        %s2182 = sand.u32 %s260, 1
        %s2183 = scalar_lea.sflag [#allocation6], %s2182
        %s2184 = sand.u32 %s260, 1
        %s2185 = smul.addr %s2184, 2
        %s2186 = scalar_lea.vmem [#allocation5], %s2185
        // Predicated region
        $region49: #{tpu_custom_call.1} parent=47 // pred_check
          %p2187 = pneg %p242
        $region50: #{tpu_custom_call.1} parent=47 // pred_check_branch
          %2189 = sbr.rel (%p2187) target = $region52
        $region51: #{tpu_custom_call.1} parent=47 // pred_region
          %s2190 = smul.u32 8, %s31
          %s2192 = ssub.s32 1024, 1024
          %2193 = vsyncadd %s2178, %s2192
          %s2194 = smul.addr %s2190, 2
          %s2195 = smul.addr %s30, 32
          %s2196 = sadd.s32 %s2194, %s2195
          %s2197 = smul.addr %s2196, 64
          %s2198 = scalar_lea.hbm %s7, %s2197
          %s2199 = sshll.u32 %s2181, 4
          %s2200 = int_to_ptr.vmem [resolvable:$true] %s2199
          %2205 = dma.vmem_to_hbm [thread:$0]  %s2200, 1024, %s2198, %s2178, 64, 64, 4
        $region52: #{tpu_custom_call.1} parent=47 // pred_fallthru
          _
        // Predicated region
        $region53: #{tpu_custom_call.1} parent=47 // pred_check
          %p2206 = pneg %p270
        $region54: #{tpu_custom_call.1} parent=47 // pred_check_branch
          %2208 = sbr.rel (%p2206) target = $region56
        $region55: #{tpu_custom_call.1} parent=47 // pred_region
          %s2210 = ssub.s32 32, 32
          %2211 = vsyncadd %s2183, %s2210
          %s2212 = smul.addr %s30, 2
          %s2213 = sadd.s32 %s31, %s2212
          %s2214 = smul.addr %s2213, 32
          %s2215 = scalar_lea.hbm %s8, %s2214
          %s2217 = sshll.u32 %s2186, 4
          %s2218 = int_to_ptr.vmem [resolvable:$true] %s2217
          %2220 = dma.vmem_to_hbm [thread:$0]  %s2218, 32, %s2215, %s2183
        $region56: #{tpu_custom_call.1} parent=47 // pred_fallthru
          _
      $region48: #{tpu_custom_call.1} parent=5 // pred_fallthru
        _
      %p2221 = scmp.le.s32.totalorder 2, %s21
      // Predicated region
      $region57: #{tpu_custom_call.1} parent=5 // pred_check
        %p2222 = pneg %p2221
      $region58: #{tpu_custom_call.1} parent=5 // pred_check_branch
        %2224 = sbr.rel (%p2222) target = $region60
      $region59: #{tpu_custom_call.1} parent=5 // pred_region
        %s2225 = ssub.s32 %s21, 2
        // Predicated region
        $region61: #{tpu_custom_call.1} parent=59 // pred_check
          %p2226 = pneg %p248
        $region62: #{tpu_custom_call.1} parent=59 // pred_check_branch
          %2228 = sbr.rel (%p2226) target = $region64
        $region63: #{tpu_custom_call.1} parent=59 // pred_region
          %s2229 = sand.u32 %s233, 1
          %s2230 = scalar_lea.sflag [#allocation4], %s2229
          %s2231 = sand.u32 %s233, 1
          %s2232 = smul.addr %s2231, 64
          %s2233 = scalar_lea.vmem [#allocation3], %s2232
          %2234 = dma.done %s2230, 1024
        $region64: #{tpu_custom_call.1} parent=59 // pred_fallthru
          _
        // Predicated region
        $region65: #{tpu_custom_call.1} parent=59 // pred_check
          %p2235 = pneg %p276
        $region66: #{tpu_custom_call.1} parent=59 // pred_check_branch
          %2237 = sbr.rel (%p2235) target = $region68
        $region67: #{tpu_custom_call.1} parent=59 // pred_region
          %s2238 = sand.u32 %s261, 1
          %s2239 = scalar_lea.sflag [#allocation6], %s2238
          %s2240 = sand.u32 %s261, 1
          %s2241 = smul.addr %s2240, 2
          %s2242 = scalar_lea.vmem [#allocation5], %s2241
          %2243 = dma.done %s2239, 32
        $region68: #{tpu_custom_call.1} parent=59 // pred_fallthru
          _
      $region60: #{tpu_custom_call.1} parent=5 // pred_fallthru
        _
    $region6: #{tpu_custom_call.1} parent=1 // loop_footer
      %s25 = sadd.s32 1, %s21
    $region7: #{tpu_custom_call.1} parent=1 // loop_footer_branch
      %20 = sbr.rel target = $region3
    $region8: #{tpu_custom_call.1} parent=1 // loop_exit
      _
    %2244 = vsyncpa [#allocation4], 1
    %s2245 = scalar_lea.sflag [#allocation4], 1
    %2246 = vsyncpa %s2245, 1
    %2247 = vsyncpa [#allocation6], 1
    %s2248 = scalar_lea.sflag [#allocation6], 1
    %2249 = vsyncpa %s2248, 1

</llo_original>
